<compile_context>
chip_gen: v7x
topology: tpu7x:2x2x1
jax: 0.10.0
libtpu: 0.0.40
codegen_flags: <defaults>
</compile_context>

<pallas_src>
import functools

import jax
import jax.numpy as jnp
from jax.experimental import pallas as pl
from jax.experimental.pallas import tpu as pltpu


# ----------------------------------------------------------------------------
# Fused kernel: one grid step = (batch b, query tile qi).
#   x_q_ref   : (tq, C)   query rows of x
#   x_kv_ref  : (N, C)    all rows of x for this batch (resident across qi)
#   pol_ref   : (1, N)    policy for this batch
#   w_qkv_ref : (C, 3C)   resident, q-columns pre-scaled
#   w_proj_ref: (C, C)    resident
#   b_proj_ref: (1, C)
#   o_ref     : (tq, C)
#   kv_ref    : (N, 2C)   VMEM scratch, K|V for the current batch
#   head_out_ref: (tq, C) VMEM scratch, per-head outputs
# ----------------------------------------------------------------------------
def _fused_attn_kernel(x_q_ref, x_kv_ref, pol_ref, w_qkv_ref, w_proj_ref,
                       b_proj_ref, o_ref, kv_ref, head_out_ref, *,
                       num_heads, eps, n_tokens, compute_dtype):
    qi = pl.program_id(1)
    tq = x_q_ref.shape[0]
    c = w_proj_ref.shape[0]
    d = c // num_heads
    n = n_tokens
    cdt = compute_dtype
    # Fast path (bf16 MXU inputs): approx EUP reciprocal + fold eps/N and the
    # row reciprocal through the PV matmul.  f32 path mirrors the reference.
    fast = jnp.dtype(cdt) != jnp.dtype(jnp.float32)

    # --- K/V projection for this batch, once per batch (first query tile).
    @pl.when(qi == 0)
    def _():
        x_kv = x_kv_ref[...].astype(cdt)                                 # (N, C)
        kv = jnp.dot(x_kv, w_qkv_ref[:, c:],
                     preferred_element_type=jnp.float32)                 # (N, 2C)
        kv_ref[...] = kv.astype(kv_ref.dtype)

    # --- Q projection for this query tile (scale already folded into w_qkv).
    x_q = x_q_ref[...].astype(cdt)                                       # (tq, C)
    q = jnp.dot(x_q, w_qkv_ref[:, :c],
                preferred_element_type=jnp.float32).astype(cdt)          # (tq, C)

    # attn_policy: 1 on the global diagonal, policy[col] elsewhere (no eye temp).
    pol = pol_ref[...].astype(jnp.float32)                               # (1, N)
    row = jax.lax.broadcasted_iota(jnp.int32, (tq, n), 0) + qi * tq
    col = jax.lax.broadcasted_iota(jnp.int32, (tq, n), 1)
    attn_policy = jnp.where(row == col, jnp.float32(1.0), pol)           # (tq, N)

    for h in range(num_heads):                                           # static unroll
        q_h = q[:, h * d:(h + 1) * d]                                    # (tq, D)
        k_h = kv_ref[:, h * d:(h + 1) * d]                               # (N, D)
        v_h = kv_ref[:, c + h * d:c + (h + 1) * d]                       # (N, D)

        # logits = q_h @ k_h^T (contraction over D, no explicit transpose).
        logits = jax.lax.dot_general(
            q_h, k_h, (((1,), (1,)), ((), ())),
            preferred_element_type=jnp.float32)                          # (tq, N)

        # softmax_with_policy (elementwise math stays in f32).
        max_att = jnp.max(logits, axis=-1, keepdims=True)
        e = jnp.exp(logits - max_att) * attn_policy
        denom = jnp.sum(e, axis=-1, keepdims=True) + eps
        inv = pl.reciprocal(denom, approx=fast)                          # (tq, 1)

        if fast:
            # (e @ v + (eps/N) * colsum(v)) * inv   -- identical math, only
            # N*D-sized elementwise work instead of two N^2 passes.
            ev = jnp.dot(e.astype(cdt), v_h,
                         preferred_element_type=jnp.float32)             # (tq, D)
            colsum_v = jnp.sum(v_h.astype(jnp.float32), axis=0,
                               keepdims=True)                            # (1, D)
            out_h = (ev + (eps / n) * colsum_v) * inv
        else:
            # f32 validation path: same op order as the PyTorch reference.
            attn = (e + eps / n) * inv                                   # (tq, N)
            out_h = jnp.dot(attn.astype(cdt), v_h,
                            preferred_element_type=jnp.float32)          # (tq, D)

        head_out_ref[:, h * d:(h + 1) * d] = out_h     # retire this head now

    # --- Output projection on the assembled (tq, C) tile, lane-dense store.
    attn_out = head_out_ref[...].astype(cdt)
    y = jnp.dot(attn_out, w_proj_ref[...], preferred_element_type=jnp.float32)
    o_ref[...] = (y + b_proj_ref[...].astype(jnp.float32)).astype(o_ref.dtype)


def _pick_q_tile(n, target):
    """Full N if small enough, else the largest 8-sublane-aligned tile <= target."""
    if n <= target:
        return n
    return max(8, (target // 8) * 8)


def attention_t(x, policy, params, num_heads, *, compute_dtype=jnp.bfloat16,
                eps=1e-6, q_tile=256):
    """Forward pass of AttentionT (policy path), fully fused.

    x: (B, N, C), policy: (B, N, 1).
    params: w_qkv (C, 3C), w_proj (C, C), b_proj (1, C)  [w = torch weight.T]
    compute_dtype: MXU input dtype (bf16 default; accumulation is always f32).
    """
    B, N, C = x.shape
    assert C % num_heads == 0
    D = C // num_heads
    scale = D ** -0.5
    cdt = jnp.dtype(x.dtype) if compute_dtype is None else jnp.dtype(compute_dtype)

    # Fold the softmax scale into the q-columns of w_qkv (free) and cast the
    # weights to the MXU compute dtype once -> half-width resident VMEM tiles.
    w_qkv = params["w_qkv"]
    w_qkv = jnp.concatenate([w_qkv[:, :C] * scale, w_qkv[:, C:]],
                            axis=-1).astype(cdt)
    w_proj = params["w_proj"].astype(cdt)
    b_proj = params["b_proj"].astype(jnp.float32)          # bias added in f32

    pol = policy.reshape(B, 1, N)            # metadata-only reshape of (B, N, 1)

    tq = _pick_q_tile(N, q_tile)
    nq = pl.cdiv(N, tq)

    kernel = functools.partial(_fused_attn_kernel, num_heads=num_heads,
                               eps=eps, n_tokens=N, compute_dtype=cdt)

    return pl.pallas_call(
        kernel,
        out_shape=jax.ShapeDtypeStruct((B, N, C), x.dtype),
        grid=(B, nq),
        in_specs=[
            pl.BlockSpec((None, tq, C), lambda b, qi: (b, qi, 0)),  # x (query rows)
            pl.BlockSpec((None, N, C), lambda b, qi: (b, 0, 0)),    # x (all rows, K/V)
            pl.BlockSpec((None, 1, N), lambda b, qi: (b, 0, 0)),    # policy
            pl.BlockSpec((C, 3 * C), lambda b, qi: (0, 0)),         # w_qkv (resident)
            pl.BlockSpec((C, C), lambda b, qi: (0, 0)),             # w_proj (resident)
            pl.BlockSpec((1, C), lambda b, qi: (0, 0)),             # b_proj (resident)
        ],
        out_specs=pl.BlockSpec((None, tq, C), lambda b, qi: (b, qi, 0)),
        scratch_shapes=[
            pltpu.VMEM((N, 2 * C), cdt),          # K|V for the current batch
            pltpu.VMEM((tq, C), jnp.float32),     # per-head outputs
        ],
        compiler_params=pltpu.CompilerParams(
            # K/V scratch is carried across the q-tile axis -> "arbitrary";
            # batch axis feeds megacore.  Raise vmem_limit_bytes here if a very
            # large N/C configuration exceeds the scoped default.
            dimension_semantics=("parallel", "arbitrary")),
    )(x, x, pol, w_qkv, w_proj, b_proj)


# ----------------------------------------------------------------------------
# Pure-JAX reference (mirrors the PyTorch forward exactly) for validation.
# ----------------------------------------------------------------------------
def reference(x, policy, params, num_heads, eps=1e-6):
    B, N, C = x.shape
    D = C // num_heads
    scale = D ** -0.5
    qkv = (x.reshape(B * N, C) @ params["w_qkv"]).reshape(B, N, 3, num_heads, D)
    qkv = qkv.transpose(2, 0, 3, 1, 4)
    q, k, v = qkv[0], qkv[1], qkv[2]
    attn = jnp.einsum("bhnd,bhmd->bhnm", q, k) * scale
    pol = policy.reshape(B, 1, 1, N).astype(jnp.float32)
    eye = jnp.eye(N, dtype=jnp.float32).reshape(1, 1, N, N)
    ap = pol + (1.0 - pol) * eye
    max_att = jnp.max(attn, axis=-1, keepdims=True)
    e = jnp.exp(attn.astype(jnp.float32) - max_att) * ap
    attn = (e + eps / N) / (jnp.sum(e, axis=-1, keepdims=True) + eps)
    out = jnp.einsum("bhnm,bhmd->bhnd", attn.astype(x.dtype), v)
    out = out.transpose(0, 2, 1, 3).reshape(B, N, C)
    return out @ params["w_proj"] + params["b_proj"].reshape(C)


if __name__ == "__main__":
    B, N, C, H = 2, 8, 32, 8  # head_dim = 4

    key = jax.random.PRNGKey(0)
    k_x, k_pol, k_wqkv, k_wproj, k_bproj = jax.random.split(key, 5)

    x = jax.random.normal(k_x, (B, N, C), dtype=jnp.float32)
    policy = (jax.random.uniform(k_pol, (B, N, 1)) > 0.3).astype(jnp.float32)

    params = {
        "w_qkv": 0.05 * jax.random.normal(k_wqkv, (C, 3 * C), dtype=jnp.float32),
        "w_proj": 0.05 * jax.random.normal(k_wproj, (C, C), dtype=jnp.float32),
        "b_proj": 0.05 * jax.random.normal(k_bproj, (1, C), dtype=jnp.float32),
    }

    ref = reference(x, policy, params, num_heads=H)

    # f32 MXU-input path: must match the PyTorch-equivalent reference tightly.
    out_f32 = jax.block_until_ready(
        attention_t(x, policy, params, num_heads=H, compute_dtype=jnp.float32))
    assert out_f32.shape == (B, N, C)
    assert jnp.allclose(out_f32, ref, rtol=1e-5, atol=1e-5), (
        f"f32 max abs err = {jnp.max(jnp.abs(out_f32 - ref))}")

    # Default path: bf16 MXU inputs + folded reciprocal/eps (f32 accumulation).
    out_bf16 = jax.block_until_ready(attention_t(x, policy, params, num_heads=H))
    assert out_bf16.shape == (B, N, C) and out_bf16.dtype == x.dtype
    assert jnp.allclose(out_bf16, ref, rtol=5e-2, atol=5e-2), (
        f"bf16 max abs err = {jnp.max(jnp.abs(out_bf16 - ref))}")

    print("KERNEL_OK")
</pallas_src>

<mosaic_0001>
module attributes {stable_mosaic.version = 11 : i64} {
  func.func @_fused_attn_kernel(%arg0: i32, %arg1: i32, %arg2: memref<1x8x32xf32, #tpu.memory_space<vmem>>, %arg3: memref<1x8x32xf32, #tpu.memory_space<vmem>>, %arg4: memref<1x1x8xf32, #tpu.memory_space<vmem>>, %arg5: memref<32x96xf32, #tpu.memory_space<vmem>>, %arg6: memref<32x32xf32, #tpu.memory_space<vmem>>, %arg7: memref<1x32xf32, #tpu.memory_space<vmem>>, %arg8: memref<1x8x32xf32, #tpu.memory_space<vmem>>, %arg9: memref<8x64xf32, #tpu.memory_space<vmem>>, %arg10: memref<8x32xf32, #tpu.memory_space<vmem>>) attributes {dimension_semantics = [#tpu.dimension_semantics<parallel>, #tpu.dimension_semantics<arbitrary>], iteration_bounds = array<i64: 2, 1>, scalar_prefetch = 0 : i64, scratch_operands = 2 : i64, tpu.core_type = #tpu.core_type<tc>, window_params = [{transform_indices = @transform_0, window_bounds = array<i64: 1, 8, 32>}, {transform_indices = @transform_1, window_bounds = array<i64: 1, 8, 32>}, {transform_indices = @transform_2, window_bounds = array<i64: 1, 1, 8>}, {pipeline_mode = #tpu.pipeline_mode<synchronous>, transform_indices = @transform_3, window_bounds = array<i64: 32, 96>}, {pipeline_mode = #tpu.pipeline_mode<synchronous>, transform_indices = @transform_4, window_bounds = array<i64: 32, 32>}, {pipeline_mode = #tpu.pipeline_mode<synchronous>, transform_indices = @transform_5, window_bounds = array<i64: 1, 32>}, {transform_indices = @transform_6, window_bounds = array<i64: 1, 8, 32>}]} {
    %c0_i32 = arith.constant 0 : i32
    %0 = arith.cmpi eq, %arg1, %c0_i32 : i32
    %1 = arith.extui %0 : i1 to i32
    %c0_i32_0 = arith.constant 0 : i32
    %2 = arith.cmpi ne, %1, %c0_i32_0 : i32
    scf.if %2 {
      %c0_100 = arith.constant 0 : index
      %c0_101 = arith.constant 0 : index
      %c0_102 = arith.constant 0 : index
      %196 = vector.load %arg3[%c0_100, %c0_101, %c0_102] : memref<1x8x32xf32, #tpu.memory_space<vmem>>, vector<1x8x32xf32>
      %197 = vector.shape_cast %196 : vector<1x8x32xf32> to vector<8x32xf32>
      %c0_103 = arith.constant 0 : index
      %c32_104 = arith.constant 32 : index
      %198 = vector.load %arg5[%c0_103, %c32_104] : memref<32x96xf32, #tpu.memory_space<vmem>>, vector<32x64xf32>
      %cst_105 = arith.constant dense<0.000000e+00> : vector<8x64xf32>
      %199 = tpu.matmul %197, %198, %cst_105 {dimension_numbers = #tpu.dot_dimension_numbers<[1], [0], [0], [1], [0, 0, 1, 1], [], []>} : vector<8x32xf32>, vector<32x64xf32>, vector<8x64xf32> -> vector<8x64xf32>
      %c0_106 = arith.constant 0 : index
      %c0_107 = arith.constant 0 : index
      %200 = vector.load %arg9[%c0_106, %c0_107] : memref<8x64xf32, #tpu.memory_space<vmem>>, vector<8x64xf32>
      tpu.vector_store %arg9[%c0_106, %c0_107], %199 {strides = array<i32>} : memref<8x64xf32, #tpu.memory_space<vmem>>, vector<8x64xf32>,
    } else {
    }
    %c0 = arith.constant 0 : index
    %c0_1 = arith.constant 0 : index
    %c0_2 = arith.constant 0 : index
    %3 = vector.load %arg2[%c0, %c0_1, %c0_2] : memref<1x8x32xf32, #tpu.memory_space<vmem>>, vector<1x8x32xf32>
    %4 = vector.shape_cast %3 : vector<1x8x32xf32> to vector<8x32xf32>
    %c0_3 = arith.constant 0 : index
    %c0_4 = arith.constant 0 : index
    %5 = vector.load %arg5[%c0_3, %c0_4] : memref<32x96xf32, #tpu.memory_space<vmem>>, vector<32x32xf32>
    %cst = arith.constant dense<0.000000e+00> : vector<8x32xf32>
    %6 = tpu.matmul %4, %5, %cst {dimension_numbers = #tpu.dot_dimension_numbers<[1], [0], [0], [1], [0, 0, 1, 1], [], []>} : vector<8x32xf32>, vector<32x32xf32>, vector<8x32xf32> -> vector<8x32xf32>
    %c0_5 = arith.constant 0 : index
    %c0_6 = arith.constant 0 : index
    %c0_7 = arith.constant 0 : index
    %7 = vector.load %arg4[%c0_5, %c0_6, %c0_7] : memref<1x1x8xf32, #tpu.memory_space<vmem>>, vector<1x1x8xf32>
    %8 = vector.shape_cast %7 : vector<1x1x8xf32> to vector<1x8xf32>
    %9 = tpu.iota {dimensions = array<i32: 0>} : vector<8x8xi32>
    %c8_i32 = arith.constant 8 : i32
    %10 = arith.muli %arg1, %c8_i32 : i32
    %11 = vector.broadcast %10 : i32 to vector<8x8xi32>
    %12 = arith.addi %9, %11 : vector<8x8xi32>
    %13 = tpu.iota {dimensions = array<i32: 1>} : vector<8x8xi32>
    %14 = arith.cmpi eq, %12, %13 : vector<8x8xi32>
    %cst_8 = arith.constant 1.000000e+00 : f32
    %15 = vector.broadcast %cst_8 : f32 to vector<8x8xf32>
    %16 = vector.shape_cast %8 : vector<1x8xf32> to vector<1x8xf32>
    %17 = vector.broadcast %16 : vector<1x8xf32> to vector<8x8xf32>
    %18 = arith.select %14, %15, %17 : vector<8x8xi1>, vector<8x8xf32>
    %19 = vector.extract_strided_slice %6 {offsets = [0, 0], sizes = [8, 4], strides = [1, 1]} : vector<8x32xf32> to vector<8x4xf32>
    %c0_9 = arith.constant 0 : index
    %c0_10 = arith.constant 0 : index
    %20 = vector.load %arg9[%c0_9, %c0_10] : memref<8x64xf32, #tpu.memory_space<vmem>>, vector<8x4xf32>
    %c0_11 = arith.constant 0 : index
    %c32 = arith.constant 32 : index
    %21 = vector.load %arg9[%c0_11, %c32] : memref<8x64xf32, #tpu.memory_space<vmem>>, vector<8x4xf32>
    %cst_12 = arith.constant dense<0.000000e+00> : vector<8x8xf32>
    %22 = tpu.matmul %19, %20, %cst_12 {dimension_numbers = #tpu.dot_dimension_numbers<[1], [1], [0], [0], [0, 0, 1, 0], [], []>} : vector<8x4xf32>, vector<8x4xf32>, vector<8x8xf32> -> vector<8x8xf32>
    %cst_13 = arith.constant dense<0xFF800000> : vector<8xf32>
    %23 = vector.multi_reduction <maximumf>, %22, %cst_13 [1] : vector<8x8xf32> to vector<8xf32>
    %24 = vector.shape_cast %23 : vector<8xf32> to vector<8x1xf32>
    %25 = vector.broadcast %24 : vector<8x1xf32> to vector<8x8xf32>
    %26 = arith.subf %22, %25 : vector<8x8xf32>
    %27 = math.exp %26 : vector<8x8xf32>
    %28 = arith.mulf %27, %18 : vector<8x8xf32>
    %cst_14 = arith.constant dense<0.000000e+00> : vector<8xf32>
    %29 = vector.multi_reduction <add>, %28, %cst_14 [1] : vector<8x8xf32> to vector<8xf32>
    %30 = vector.shape_cast %29 : vector<8xf32> to vector<8x1xf32>
    %cst_15 = arith.constant 9.99999997E-7 : f32
    %31 = vector.broadcast %cst_15 : f32 to vector<8x1xf32>
    %32 = arith.addf %30, %31 : vector<8x1xf32>
    %33 = tpu.reciprocal %32 : vector<8x1xf32> -> vector<8x1xf32>
    %cst_16 = arith.constant 1.250000e-07 : f32
    %34 = vector.broadcast %cst_16 : f32 to vector<8x8xf32>
    %35 = arith.addf %28, %34 : vector<8x8xf32>
    %36 = vector.broadcast %33 : vector<8x1xf32> to vector<8x8xf32>
    %37 = arith.mulf %35, %36 : vector<8x8xf32>
    %cst_17 = arith.constant dense<0.000000e+00> : vector<8x4xf32>
    %38 = tpu.matmul %37, %21, %cst_17 {dimension_numbers = #tpu.dot_dimension_numbers<[1], [0], [0], [1], [0, 0, 1, 1], [], []>} : vector<8x8xf32>, vector<8x4xf32>, vector<8x4xf32> -> vector<8x4xf32>
    %c0_18 = arith.constant 0 : index
    %c0_19 = arith.constant 0 : index
    %39 = vector.load %arg10[%c0_18, %c0_19] : memref<8x32xf32, #tpu.memory_space<vmem>>, vector<8x4xf32>
    tpu.vector_store %arg10[%c0_18, %c0_19], %38 {strides = array<i32>} : memref<8x32xf32, #tpu.memory_space<vmem>>, vector<8x4xf32>,
    %40 = vector.extract_strided_slice %6 {offsets = [0, 4], sizes = [8, 4], strides = [1, 1]} : vector<8x32xf32> to vector<8x4xf32>
    %c0_20 = arith.constant 0 : index
    %c4 = arith.constant 4 : index
    %41 = vector.load %arg9[%c0_20, %c4] : memref<8x64xf32, #tpu.memory_space<vmem>>, vector<8x4xf32>
    %c0_21 = arith.constant 0 : index
    %c36 = arith.constant 36 : index
    %42 = vector.load %arg9[%c0_21, %c36] : memref<8x64xf32, #tpu.memory_space<vmem>>, vector<8x4xf32>
    %cst_22 = arith.constant dense<0.000000e+00> : vector<8x8xf32>
    %43 = tpu.matmul %40, %41, %cst_22 {dimension_numbers = #tpu.dot_dimension_numbers<[1], [1], [0], [0], [0, 0, 1, 0], [], []>} : vector<8x4xf32>, vector<8x4xf32>, vector<8x8xf32> -> vector<8x8xf32>
    %cst_23 = arith.constant dense<0xFF800000> : vector<8xf32>
    %44 = vector.multi_reduction <maximumf>, %43, %cst_23 [1] : vector<8x8xf32> to vector<8xf32>
    %45 = vector.shape_cast %44 : vector<8xf32> to vector<8x1xf32>
    %46 = vector.broadcast %45 : vector<8x1xf32> to vector<8x8xf32>
    %47 = arith.subf %43, %46 : vector<8x8xf32>
    %48 = math.exp %47 : vector<8x8xf32>
    %49 = arith.mulf %48, %18 : vector<8x8xf32>
    %cst_24 = arith.constant dense<0.000000e+00> : vector<8xf32>
    %50 = vector.multi_reduction <add>, %49, %cst_24 [1] : vector<8x8xf32> to vector<8xf32>
    %51 = vector.shape_cast %50 : vector<8xf32> to vector<8x1xf32>
    %cst_25 = arith.constant 9.99999997E-7 : f32
    %52 = vector.broadcast %cst_25 : f32 to vector<8x1xf32>
    %53 = arith.addf %51, %52 : vector<8x1xf32>
    %54 = tpu.reciprocal %53 : vector<8x1xf32> -> vector<8x1xf32>
    %cst_26 = arith.constant 1.250000e-07 : f32
    %55 = vector.broadcast %cst_26 : f32 to vector<8x8xf32>
    %56 = arith.addf %49, %55 : vector<8x8xf32>
    %57 = vector.broadcast %54 : vector<8x1xf32> to vector<8x8xf32>
    %58 = arith.mulf %56, %57 : vector<8x8xf32>
    %cst_27 = arith.constant dense<0.000000e+00> : vector<8x4xf32>
    %59 = tpu.matmul %58, %42, %cst_27 {dimension_numbers = #tpu.dot_dimension_numbers<[1], [0], [0], [1], [0, 0, 1, 1], [], []>} : vector<8x8xf32>, vector<8x4xf32>, vector<8x4xf32> -> vector<8x4xf32>
    %c0_28 = arith.constant 0 : index
    %c4_29 = arith.constant 4 : index
    %60 = vector.load %arg10[%c0_28, %c4_29] : memref<8x32xf32, #tpu.memory_space<vmem>>, vector<8x4xf32>
    tpu.vector_store %arg10[%c0_28, %c4_29], %59 {strides = array<i32>} : memref<8x32xf32, #tpu.memory_space<vmem>>, vector<8x4xf32>,
    %61 = vector.extract_strided_slice %6 {offsets = [0, 8], sizes = [8, 4], strides = [1, 1]} : vector<8x32xf32> to vector<8x4xf32>
    %c0_30 = arith.constant 0 : index
    %c8 = arith.constant 8 : index
    %62 = vector.load %arg9[%c0_30, %c8] : memref<8x64xf32, #tpu.memory_space<vmem>>, vector<8x4xf32>
    %c0_31 = arith.constant 0 : index
    %c40 = arith.constant 40 : index
    %63 = vector.load %arg9[%c0_31, %c40] : memref<8x64xf32, #tpu.memory_space<vmem>>, vector<8x4xf32>
    %cst_32 = arith.constant dense<0.000000e+00> : vector<8x8xf32>
    %64 = tpu.matmul %61, %62, %cst_32 {dimension_numbers = #tpu.dot_dimension_numbers<[1], [1], [0], [0], [0, 0, 1, 0], [], []>} : vector<8x4xf32>, vector<8x4xf32>, vector<8x8xf32> -> vector<8x8xf32>
    %cst_33 = arith.constant dense<0xFF800000> : vector<8xf32>
    %65 = vector.multi_reduction <maximumf>, %64, %cst_33 [1] : vector<8x8xf32> to vector<8xf32>
    %66 = vector.shape_cast %65 : vector<8xf32> to vector<8x1xf32>
    %67 = vector.broadcast %66 : vector<8x1xf32> to vector<8x8xf32>
    %68 = arith.subf %64, %67 : vector<8x8xf32>
    %69 = math.exp %68 : vector<8x8xf32>
    %70 = arith.mulf %69, %18 : vector<8x8xf32>
    %cst_34 = arith.constant dense<0.000000e+00> : vector<8xf32>
    %71 = vector.multi_reduction <add>, %70, %cst_34 [1] : vector<8x8xf32> to vector<8xf32>
    %72 = vector.shape_cast %71 : vector<8xf32> to vector<8x1xf32>
    %cst_35 = arith.constant 9.99999997E-7 : f32
    %73 = vector.broadcast %cst_35 : f32 to vector<8x1xf32>
    %74 = arith.addf %72, %73 : vector<8x1xf32>
    %75 = tpu.reciprocal %74 : vector<8x1xf32> -> vector<8x1xf32>
    %cst_36 = arith.constant 1.250000e-07 : f32
    %76 = vector.broadcast %cst_36 : f32 to vector<8x8xf32>
    %77 = arith.addf %70, %76 : vector<8x8xf32>
    %78 = vector.broadcast %75 : vector<8x1xf32> to vector<8x8xf32>
    %79 = arith.mulf %77, %78 : vector<8x8xf32>
    %cst_37 = arith.constant dense<0.000000e+00> : vector<8x4xf32>
    %80 = tpu.matmul %79, %63, %cst_37 {dimension_numbers = #tpu.dot_dimension_numbers<[1], [0], [0], [1], [0, 0, 1, 1], [], []>} : vector<8x8xf32>, vector<8x4xf32>, vector<8x4xf32> -> vector<8x4xf32>
    %c0_38 = arith.constant 0 : index
    %c8_39 = arith.constant 8 : index
    %81 = vector.load %arg10[%c0_38, %c8_39] : memref<8x32xf32, #tpu.memory_space<vmem>>, vector<8x4xf32>
    tpu.vector_store %arg10[%c0_38, %c8_39], %80 {strides = array<i32>} : memref<8x32xf32, #tpu.memory_space<vmem>>, vector<8x4xf32>,
    %82 = vector.extract_strided_slice %6 {offsets = [0, 12], sizes = [8, 4], strides = [1, 1]} : vector<8x32xf32> to vector<8x4xf32>
    %c0_40 = arith.constant 0 : index
    %c12 = arith.constant 12 : index
    %83 = vector.load %arg9[%c0_40, %c12] : memref<8x64xf32, #tpu.memory_space<vmem>>, vector<8x4xf32>
    %c0_41 = arith.constant 0 : index
    %c44 = arith.constant 44 : index
    %84 = vector.load %arg9[%c0_41, %c44] : memref<8x64xf32, #tpu.memory_space<vmem>>, vector<8x4xf32>
    %cst_42 = arith.constant dense<0.000000e+00> : vector<8x8xf32>
    %85 = tpu.matmul %82, %83, %cst_42 {dimension_numbers = #tpu.dot_dimension_numbers<[1], [1], [0], [0], [0, 0, 1, 0], [], []>} : vector<8x4xf32>, vector<8x4xf32>, vector<8x8xf32> -> vector<8x8xf32>
    %cst_43 = arith.constant dense<0xFF800000> : vector<8xf32>
    %86 = vector.multi_reduction <maximumf>, %85, %cst_43 [1] : vector<8x8xf32> to vector<8xf32>
    %87 = vector.shape_cast %86 : vector<8xf32> to vector<8x1xf32>
    %88 = vector.broadcast %87 : vector<8x1xf32> to vector<8x8xf32>
    %89 = arith.subf %85, %88 : vector<8x8xf32>
    %90 = math.exp %89 : vector<8x8xf32>
    %91 = arith.mulf %90, %18 : vector<8x8xf32>
    %cst_44 = arith.constant dense<0.000000e+00> : vector<8xf32>
    %92 = vector.multi_reduction <add>, %91, %cst_44 [1] : vector<8x8xf32> to vector<8xf32>
    %93 = vector.shape_cast %92 : vector<8xf32> to vector<8x1xf32>
    %cst_45 = arith.constant 9.99999997E-7 : f32
    %94 = vector.broadcast %cst_45 : f32 to vector<8x1xf32>
    %95 = arith.addf %93, %94 : vector<8x1xf32>
    %96 = tpu.reciprocal %95 : vector<8x1xf32> -> vector<8x1xf32>
    %cst_46 = arith.constant 1.250000e-07 : f32
    %97 = vector.broadcast %cst_46 : f32 to vector<8x8xf32>
    %98 = arith.addf %91, %97 : vector<8x8xf32>
    %99 = vector.broadcast %96 : vector<8x1xf32> to vector<8x8xf32>
    %100 = arith.mulf %98, %99 : vector<8x8xf32>
    %cst_47 = arith.constant dense<0.000000e+00> : vector<8x4xf32>
    %101 = tpu.matmul %100, %84, %cst_47 {dimension_numbers = #tpu.dot_dimension_numbers<[1], [0], [0], [1], [0, 0, 1, 1], [], []>} : vector<8x8xf32>, vector<8x4xf32>, vector<8x4xf32> -> vector<8x4xf32>
    %c0_48 = arith.constant 0 : index
    %c12_49 = arith.constant 12 : index
    %102 = vector.load %arg10[%c0_48, %c12_49] : memref<8x32xf32, #tpu.memory_space<vmem>>, vector<8x4xf32>
    tpu.vector_store %arg10[%c0_48, %c12_49], %101 {strides = array<i32>} : memref<8x32xf32, #tpu.memory_space<vmem>>, vector<8x4xf32>,
    %103 = vector.extract_strided_slice %6 {offsets = [0, 16], sizes = [8, 4], strides = [1, 1]} : vector<8x32xf32> to vector<8x4xf32>
    %c0_50 = arith.constant 0 : index
    %c16 = arith.constant 16 : index
    %104 = vector.load %arg9[%c0_50, %c16] : memref<8x64xf32, #tpu.memory_space<vmem>>, vector<8x4xf32>
    %c0_51 = arith.constant 0 : index
    %c48 = arith.constant 48 : index
    %105 = vector.load %arg9[%c0_51, %c48] : memref<8x64xf32, #tpu.memory_space<vmem>>, vector<8x4xf32>
    %cst_52 = arith.constant dense<0.000000e+00> : vector<8x8xf32>
    %106 = tpu.matmul %103, %104, %cst_52 {dimension_numbers = #tpu.dot_dimension_numbers<[1], [1], [0], [0], [0, 0, 1, 0], [], []>} : vector<8x4xf32>, vector<8x4xf32>, vector<8x8xf32> -> vector<8x8xf32>
    %cst_53 = arith.constant dense<0xFF800000> : vector<8xf32>
    %107 = vector.multi_reduction <maximumf>, %106, %cst_53 [1] : vector<8x8xf32> to vector<8xf32>
    %108 = vector.shape_cast %107 : vector<8xf32> to vector<8x1xf32>
    %109 = vector.broadcast %108 : vector<8x1xf32> to vector<8x8xf32>
    %110 = arith.subf %106, %109 : vector<8x8xf32>
    %111 = math.exp %110 : vector<8x8xf32>
    %112 = arith.mulf %111, %18 : vector<8x8xf32>
    %cst_54 = arith.constant dense<0.000000e+00> : vector<8xf32>
    %113 = vector.multi_reduction <add>, %112, %cst_54 [1] : vector<8x8xf32> to vector<8xf32>
    %114 = vector.shape_cast %113 : vector<8xf32> to vector<8x1xf32>
    %cst_55 = arith.constant 9.99999997E-7 : f32
    %115 = vector.broadcast %cst_55 : f32 to vector<8x1xf32>
    %116 = arith.addf %114, %115 : vector<8x1xf32>
    %117 = tpu.reciprocal %116 : vector<8x1xf32> -> vector<8x1xf32>
    %cst_56 = arith.constant 1.250000e-07 : f32
    %118 = vector.broadcast %cst_56 : f32 to vector<8x8xf32>
    %119 = arith.addf %112, %118 : vector<8x8xf32>
    %120 = vector.broadcast %117 : vector<8x1xf32> to vector<8x8xf32>
    %121 = arith.mulf %119, %120 : vector<8x8xf32>
    %cst_57 = arith.constant dense<0.000000e+00> : vector<8x4xf32>
    %122 = tpu.matmul %121, %105, %cst_57 {dimension_numbers = #tpu.dot_dimension_numbers<[1], [0], [0], [1], [0, 0, 1, 1], [], []>} : vector<8x8xf32>, vector<8x4xf32>, vector<8x4xf32> -> vector<8x4xf32>
    %c0_58 = arith.constant 0 : index
    %c16_59 = arith.constant 16 : index
    %123 = vector.load %arg10[%c0_58, %c16_59] : memref<8x32xf32, #tpu.memory_space<vmem>>, vector<8x4xf32>
    tpu.vector_store %arg10[%c0_58, %c16_59], %122 {strides = array<i32>} : memref<8x32xf32, #tpu.memory_space<vmem>>, vector<8x4xf32>,
    %124 = vector.extract_strided_slice %6 {offsets = [0, 20], sizes = [8, 4], strides = [1, 1]} : vector<8x32xf32> to vector<8x4xf32>
    %c0_60 = arith.constant 0 : index
    %c20 = arith.constant 20 : index
    %125 = vector.load %arg9[%c0_60, %c20] : memref<8x64xf32, #tpu.memory_space<vmem>>, vector<8x4xf32>
    %c0_61 = arith.constant 0 : index
    %c52 = arith.constant 52 : index
    %126 = vector.load %arg9[%c0_61, %c52] : memref<8x64xf32, #tpu.memory_space<vmem>>, vector<8x4xf32>
    %cst_62 = arith.constant dense<0.000000e+00> : vector<8x8xf32>
    %127 = tpu.matmul %124, %125, %cst_62 {dimension_numbers = #tpu.dot_dimension_numbers<[1], [1], [0], [0], [0, 0, 1, 0], [], []>} : vector<8x4xf32>, vector<8x4xf32>, vector<8x8xf32> -> vector<8x8xf32>
    %cst_63 = arith.constant dense<0xFF800000> : vector<8xf32>
    %128 = vector.multi_reduction <maximumf>, %127, %cst_63 [1] : vector<8x8xf32> to vector<8xf32>
    %129 = vector.shape_cast %128 : vector<8xf32> to vector<8x1xf32>
    %130 = vector.broadcast %129 : vector<8x1xf32> to vector<8x8xf32>
    %131 = arith.subf %127, %130 : vector<8x8xf32>
    %132 = math.exp %131 : vector<8x8xf32>
    %133 = arith.mulf %132, %18 : vector<8x8xf32>
    %cst_64 = arith.constant dense<0.000000e+00> : vector<8xf32>
    %134 = vector.multi_reduction <add>, %133, %cst_64 [1] : vector<8x8xf32> to vector<8xf32>
    %135 = vector.shape_cast %134 : vector<8xf32> to vector<8x1xf32>
    %cst_65 = arith.constant 9.99999997E-7 : f32
    %136 = vector.broadcast %cst_65 : f32 to vector<8x1xf32>
    %137 = arith.addf %135, %136 : vector<8x1xf32>
    %138 = tpu.reciprocal %137 : vector<8x1xf32> -> vector<8x1xf32>
    %cst_66 = arith.constant 1.250000e-07 : f32
    %139 = vector.broadcast %cst_66 : f32 to vector<8x8xf32>
    %140 = arith.addf %133, %139 : vector<8x8xf32>
    %141 = vector.broadcast %138 : vector<8x1xf32> to vector<8x8xf32>
    %142 = arith.mulf %140, %141 : vector<8x8xf32>
    %cst_67 = arith.constant dense<0.000000e+00> : vector<8x4xf32>
    %143 = tpu.matmul %142, %126, %cst_67 {dimension_numbers = #tpu.dot_dimension_numbers<[1], [0], [0], [1], [0, 0, 1, 1], [], []>} : vector<8x8xf32>, vector<8x4xf32>, vector<8x4xf32> -> vector<8x4xf32>
    %c0_68 = arith.constant 0 : index
    %c20_69 = arith.constant 20 : index
    %144 = vector.load %arg10[%c0_68, %c20_69] : memref<8x32xf32, #tpu.memory_space<vmem>>, vector<8x4xf32>
    tpu.vector_store %arg10[%c0_68, %c20_69], %143 {strides = array<i32>} : memref<8x32xf32, #tpu.memory_space<vmem>>, vector<8x4xf32>,
    %145 = vector.extract_strided_slice %6 {offsets = [0, 24], sizes = [8, 4], strides = [1, 1]} : vector<8x32xf32> to vector<8x4xf32>
    %c0_70 = arith.constant 0 : index
    %c24 = arith.constant 24 : index
    %146 = vector.load %arg9[%c0_70, %c24] : memref<8x64xf32, #tpu.memory_space<vmem>>, vector<8x4xf32>
    %c0_71 = arith.constant 0 : index
    %c56 = arith.constant 56 : index
    %147 = vector.load %arg9[%c0_71, %c56] : memref<8x64xf32, #tpu.memory_space<vmem>>, vector<8x4xf32>
    %cst_72 = arith.constant dense<0.000000e+00> : vector<8x8xf32>
    %148 = tpu.matmul %145, %146, %cst_72 {dimension_numbers = #tpu.dot_dimension_numbers<[1], [1], [0], [0], [0, 0, 1, 0], [], []>} : vector<8x4xf32>, vector<8x4xf32>, vector<8x8xf32> -> vector<8x8xf32>
    %cst_73 = arith.constant dense<0xFF800000> : vector<8xf32>
    %149 = vector.multi_reduction <maximumf>, %148, %cst_73 [1] : vector<8x8xf32> to vector<8xf32>
    %150 = vector.shape_cast %149 : vector<8xf32> to vector<8x1xf32>
    %151 = vector.broadcast %150 : vector<8x1xf32> to vector<8x8xf32>
    %152 = arith.subf %148, %151 : vector<8x8xf32>
    %153 = math.exp %152 : vector<8x8xf32>
    %154 = arith.mulf %153, %18 : vector<8x8xf32>
    %cst_74 = arith.constant dense<0.000000e+00> : vector<8xf32>
    %155 = vector.multi_reduction <add>, %154, %cst_74 [1] : vector<8x8xf32> to vector<8xf32>
    %156 = vector.shape_cast %155 : vector<8xf32> to vector<8x1xf32>
    %cst_75 = arith.constant 9.99999997E-7 : f32
    %157 = vector.broadcast %cst_75 : f32 to vector<8x1xf32>
    %158 = arith.addf %156, %157 : vector<8x1xf32>
    %159 = tpu.reciprocal %158 : vector<8x1xf32> -> vector<8x1xf32>
    %cst_76 = arith.constant 1.250000e-07 : f32
    %160 = vector.broadcast %cst_76 : f32 to vector<8x8xf32>
    %161 = arith.addf %154, %160 : vector<8x8xf32>
    %162 = vector.broadcast %159 : vector<8x1xf32> to vector<8x8xf32>
    %163 = arith.mulf %161, %162 : vector<8x8xf32>
    %cst_77 = arith.constant dense<0.000000e+00> : vector<8x4xf32>
    %164 = tpu.matmul %163, %147, %cst_77 {dimension_numbers = #tpu.dot_dimension_numbers<[1], [0], [0], [1], [0, 0, 1, 1], [], []>} : vector<8x8xf32>, vector<8x4xf32>, vector<8x4xf32> -> vector<8x4xf32>
    %c0_78 = arith.constant 0 : index
    %c24_79 = arith.constant 24 : index
    %165 = vector.load %arg10[%c0_78, %c24_79] : memref<8x32xf32, #tpu.memory_space<vmem>>, vector<8x4xf32>
    tpu.vector_store %arg10[%c0_78, %c24_79], %164 {strides = array<i32>} : memref<8x32xf32, #tpu.memory_space<vmem>>, vector<8x4xf32>,
    %166 = vector.extract_strided_slice %6 {offsets = [0, 28], sizes = [8, 4], strides = [1, 1]} : vector<8x32xf32> to vector<8x4xf32>
    %c0_80 = arith.constant 0 : index
    %c28 = arith.constant 28 : index
    %167 = vector.load %arg9[%c0_80, %c28] : memref<8x64xf32, #tpu.memory_space<vmem>>, vector<8x4xf32>
    %c0_81 = arith.constant 0 : index
    %c60 = arith.constant 60 : index
    %168 = vector.load %arg9[%c0_81, %c60] : memref<8x64xf32, #tpu.memory_space<vmem>>, vector<8x4xf32>
    %cst_82 = arith.constant dense<0.000000e+00> : vector<8x8xf32>
    %169 = tpu.matmul %166, %167, %cst_82 {dimension_numbers = #tpu.dot_dimension_numbers<[1], [1], [0], [0], [0, 0, 1, 0], [], []>} : vector<8x4xf32>, vector<8x4xf32>, vector<8x8xf32> -> vector<8x8xf32>
    %cst_83 = arith.constant dense<0xFF800000> : vector<8xf32>
    %170 = vector.multi_reduction <maximumf>, %169, %cst_83 [1] : vector<8x8xf32> to vector<8xf32>
    %171 = vector.shape_cast %170 : vector<8xf32> to vector<8x1xf32>
    %172 = vector.broadcast %171 : vector<8x1xf32> to vector<8x8xf32>
    %173 = arith.subf %169, %172 : vector<8x8xf32>
    %174 = math.exp %173 : vector<8x8xf32>
    %175 = arith.mulf %174, %18 : vector<8x8xf32>
    %cst_84 = arith.constant dense<0.000000e+00> : vector<8xf32>
    %176 = vector.multi_reduction <add>, %175, %cst_84 [1] : vector<8x8xf32> to vector<8xf32>
    %177 = vector.shape_cast %176 : vector<8xf32> to vector<8x1xf32>
    %cst_85 = arith.constant 9.99999997E-7 : f32
    %178 = vector.broadcast %cst_85 : f32 to vector<8x1xf32>
    %179 = arith.addf %177, %178 : vector<8x1xf32>
    %180 = tpu.reciprocal %179 : vector<8x1xf32> -> vector<8x1xf32>
    %cst_86 = arith.constant 1.250000e-07 : f32
    %181 = vector.broadcast %cst_86 : f32 to vector<8x8xf32>
    %182 = arith.addf %175, %181 : vector<8x8xf32>
    %183 = vector.broadcast %180 : vector<8x1xf32> to vector<8x8xf32>
    %184 = arith.mulf %182, %183 : vector<8x8xf32>
    %cst_87 = arith.constant dense<0.000000e+00> : vector<8x4xf32>
    %185 = tpu.matmul %184, %168, %cst_87 {dimension_numbers = #tpu.dot_dimension_numbers<[1], [0], [0], [1], [0, 0, 1, 1], [], []>} : vector<8x8xf32>, vector<8x4xf32>, vector<8x4xf32> -> vector<8x4xf32>
    %c0_88 = arith.constant 0 : index
    %c28_89 = arith.constant 28 : index
    %186 = vector.load %arg10[%c0_88, %c28_89] : memref<8x32xf32, #tpu.memory_space<vmem>>, vector<8x4xf32>
    tpu.vector_store %arg10[%c0_88, %c28_89], %185 {strides = array<i32>} : memref<8x32xf32, #tpu.memory_space<vmem>>, vector<8x4xf32>,
    %c0_90 = arith.constant 0 : index
    %c0_91 = arith.constant 0 : index
    %187 = vector.load %arg10[%c0_90, %c0_91] : memref<8x32xf32, #tpu.memory_space<vmem>>, vector<8x32xf32>
    %c0_92 = arith.constant 0 : index
    %c0_93 = arith.constant 0 : index
    %188 = vector.load %arg6[%c0_92, %c0_93] : memref<32x32xf32, #tpu.memory_space<vmem>>, vector<32x32xf32>
    %cst_94 = arith.constant dense<0.000000e+00> : vector<8x32xf32>
    %189 = tpu.matmul %187, %188, %cst_94 {dimension_numbers = #tpu.dot_dimension_numbers<[1], [0], [0], [1], [0, 0, 1, 1], [], []>} : vector<8x32xf32>, vector<32x32xf32>, vector<8x32xf32> -> vector<8x32xf32>
    %c0_95 = arith.constant 0 : index
    %c0_96 = arith.constant 0 : index
    %190 = vector.load %arg7[%c0_95, %c0_96] : memref<1x32xf32, #tpu.memory_space<vmem>>, vector<1x32xf32>
    %191 = vector.broadcast %190 : vector<1x32xf32> to vector<8x32xf32>
    %192 = arith.addf %189, %191 : vector<8x32xf32>
    %c0_97 = arith.constant 0 : index
    %c0_98 = arith.constant 0 : index
    %c0_99 = arith.constant 0 : index
    %193 = vector.load %arg8[%c0_97, %c0_98, %c0_99] : memref<1x8x32xf32, #tpu.memory_space<vmem>>, vector<1x8x32xf32>
    %194 = vector.shape_cast %193 : vector<1x8x32xf32> to vector<8x32xf32>
    %195 = vector.shape_cast %192 : vector<8x32xf32> to vector<1x8x32xf32>
    tpu.vector_store %arg8[%c0_97, %c0_98, %c0_99], %195 {strides = array<i32>} : memref<1x8x32xf32, #tpu.memory_space<vmem>>, vector<1x8x32xf32>,
    return
  }
  func.func @transform_0(%arg0: i32, %arg1: i32) -> (i32, i32, i32) {
    %c0_i32 = arith.constant 0 : i32
    %c0_i32_0 = arith.constant 0 : i32
    return %arg0, %arg1, %c0_i32 : i32, i32, i32
  }
  func.func @transform_1(%arg0: i32, %arg1: i32) -> (i32, i32, i32) {
    %c0_i32 = arith.constant 0 : i32
    %c0_i32_0 = arith.constant 0 : i32
    %c0_i32_1 = arith.constant 0 : i32
    return %arg0, %c0_i32, %c0_i32_0 : i32, i32, i32
  }
  func.func @transform_2(%arg0: i32, %arg1: i32) -> (i32, i32, i32) {
    %c0_i32 = arith.constant 0 : i32
    %c0_i32_0 = arith.constant 0 : i32
    %c0_i32_1 = arith.constant 0 : i32
    return %arg0, %c0_i32, %c0_i32_0 : i32, i32, i32
  }
  func.func @transform_3(%arg0: i32, %arg1: i32) -> (i32, i32) {
    %c0_i32 = arith.constant 0 : i32
    %c0_i32_0 = arith.constant 0 : i32
    %c0_i32_1 = arith.constant 0 : i32
    return %c0_i32, %c0_i32_0 : i32, i32
  }
  func.func @transform_4(%arg0: i32, %arg1: i32) -> (i32, i32) {
    %c0_i32 = arith.constant 0 : i32
    %c0_i32_0 = arith.constant 0 : i32
    %c0_i32_1 = arith.constant 0 : i32
    return %c0_i32, %c0_i32_0 : i32, i32
  }
  func.func @transform_5(%arg0: i32, %arg1: i32) -> (i32, i32) {
    %c0_i32 = arith.constant 0 : i32
    %c0_i32_0 = arith.constant 0 : i32
    %c0_i32_1 = arith.constant 0 : i32
    return %c0_i32, %c0_i32_0 : i32, i32
  }
  func.func @transform_6(%arg0: i32, %arg1: i32) -> (i32, i32, i32) {
    %c0_i32 = arith.constant 0 : i32
    %c0_i32_0 = arith.constant 0 : i32
    return %arg0, %arg1, %c0_i32 : i32, i32, i32
  }
}

</mosaic_0001>

<llo_original>
// kernel: tpu_custom_call.1
$region0: #{tpu_custom_call.1}
  #allocation0 [shape = 'u32[]', space=smem, size = 0x4, offset = 0x4, fixed_abs, tag = 'smem constant byte address 0x4 - core index']
  #allocation1 [shape = 'u32[144,128]{1,0:T(1,128)}', space=vmem, size = 0x12000, scoped, tag = 'internal scratch']
  #allocation2 [shape = 'f32[8,64]{1,0:T(8,128)}', space=vmem, size = 0x1000, scoped, tag = 'scratch operand']
  #allocation3 [shape = 'f32[8,32]{1,0:T(8,128)}', space=vmem, size = 0x1000, scoped, tag = 'scratch operand']
  %s0 = inlined_call_operand.hbm [shape: f32[2,8,32], index: 0, kind: input, shape index: {}]
  %s1 = inlined_call_operand.hbm [shape: f32[2,8,32], index: 1, kind: input, shape index: {}]
  %s2 = inlined_call_operand.vmem [shape: f32[2,1,8], index: 2, kind: input, shape index: {}]
  %s3 = inlined_call_operand.hbm [shape: f32[32,96], index: 3, kind: input, shape index: {}]
  %s4 = inlined_call_operand.hbm [shape: f32[32,32], index: 4, kind: input, shape index: {}]
  %s5 = inlined_call_operand.vmem [shape: f32[1,32], index: 5, kind: input, shape index: {}]
  %s6 = inlined_call_operand.hbm [shape: f32[2,8,32], index: 6, kind: output, shape index: {}]
  %s7 = sld [smem:[#allocation0]]
  $region77: #{tpu_custom_call.1} parent=0
    _
  %s9 = ssub.s32 1, %s7
  %s10 = scalar_select 0, %s9, %s7
  $region1: #{tpu_custom_call.1} parent=0
    #allocation4 [shape = 'u8[8192]{0}', space=vmem, size = 0x2000, scoped, tag = 'input window, operand 0']
    #allocation5 [shape = 's32[2]{0}', space=sflag, size = 0x8, scoped, tag = 'scoped memory for tpu_custom_call.1']
    #allocation6 [shape = 's32[2]{0}', space=sflag, size = 0x8, scoped, tag = 'scoped memory for tpu_custom_call.1']
    #allocation7 [shape = 'u8[8192]{0}', space=vmem, size = 0x2000, scoped, tag = 'input window, operand 1']
    #allocation8 [shape = 's32[2]{0}', space=sflag, size = 0x8, scoped, tag = 'scoped memory for tpu_custom_call.1']
    #allocation9 [shape = 'u8[16384]{0}', space=vmem, size = 0x4000, scoped, tag = 'input window, operand 3, single buffered']
    #allocation10 [shape = 'u8[16384]{0}', space=vmem, size = 0x4000, scoped, tag = 'input window, operand 4, single buffered']
    #allocation11 [shape = 's32[1]{0}', space=sflag, size = 0x4, scoped, tag = 'scoped memory for tpu_custom_call.1']
    #allocation12 [shape = 'u8[8192]{0}', space=vmem, size = 0x2000, scoped, tag = 'output window, operand 0']
    %11 = vsyncpa [#allocation5], 0
    %s12 = scalar_lea.sflag [#allocation5], 1
    %13 = vsyncpa %s12, 0
    %14 = vsyncpa [#allocation8], 0
    %s15 = scalar_lea.sflag [#allocation8], 1
    %16 = vsyncpa %s15, 0
    %17 = vsyncpa [#allocation11], 0
    %18 = vsyncpa [#allocation6], 0
    %s19 = scalar_lea.sflag [#allocation6], 1
    %20 = vsyncpa %s19, 0
    loop: start=0, step=1, limit=4
    $region2: #{tpu_custom_call.1} parent=1 // loop_pre_header
      _
    $region3: #{tpu_custom_call.1} parent=1 // loop_header
      %s22 = sphi 0, %s26
      %p23 = scmp.ge.s32.totalorder %s22, 4
      %s29 = sphi 0, %s41
      %s30 = sphi 0, %s37
      %s31 = sphi 0, %s29
      %s32 = sphi 0, %s30
      %s33 = sphi 0, %s31
      %s34 = sphi 0, %s32
      %s46 = sphi 0, %s48
      %s49 = sphi 0, %s46
      %s50 = sphi 0, %s49
      %s66 = sphi 0, %s50
      %s72 = sphi 0, %s74
      %s75 = sphi 0, %s72
      %s76 = sphi 0, %s75
      %s92 = sphi 0, %s76
      %s98 = sphi 0, %s100
      %s101 = sphi 0, %s98
      %s102 = sphi 0, %s101
      %s118 = sphi 0, %s102
      %s122 = sphi 0, %s122
      %s124 = sphi 0, %s122
      %s125 = sphi 0, %s124
      %s139 = sphi 0, %s125
      %s143 = sphi 0, %s143
      %s145 = sphi 0, %s143
      %s146 = sphi 0, %s145
      %s160 = sphi 0, %s146
      %s164 = sphi 0, %s164
      %s166 = sphi 0, %s164
      %s167 = sphi 0, %s166
      %s181 = sphi 0, %s167
      %s189 = sphi 0, %s191
      %s192 = sphi 0, %s189
      %s193 = sphi 0, %s192
      %s209 = sphi 0, %s193
    $region4: #{tpu_custom_call.1} parent=1 // loop_header_branch
      %25 = sbr.rel (%p23) target = $region8
    $region5: #{tpu_custom_call.1} parent=1 // loop_body
      %s27 = ssub.s32 %s22, 1
      %s28 = ssub.s32 %s22, 2
      %s35 = sadd.s32 1, %s30
      %p36 = scmp.ge.s32.totalorder %s35, 1
      %s37 = scalar_select %p36, 0, %s35
      %s38 = sadd.s32 1, %s29
      %s39 = scalar_select %p36, %s38, %s29
      %p40 = scmp.ge.s32.totalorder %s39, 2
      %s41 = scalar_select %p40, 0, %s39
      %s42 = ssub.s32 %s29, %s41
      %s43 = ssub.s32 %s30, %s37
      %s44 = sor.u32 %s42, %s43
      %p45 = scmp.eq.s32.totalorder %s44, 0
      %s47 = sadd.s32 %s46, 1
      %s48 = scalar_select %p45, %s46, %s47
      %p51 = pneg %p45
      %p52 = scmp.eq.s32.totalorder %s22, 1
      %p53 = por %p51, %p52
      %p54 = scmp.ne.s32.totalorder %s46, %s49
      %p55 = scmp.eq.s32.totalorder %s22, 0
      %p56 = por %p54, %p55
      %p57 = scmp.ne.s32.totalorder %s46, %s49
      %p58 = scmp.eq.s32.totalorder %s27, 1
      %p59 = por %p57, %p58
      %p60 = scmp.ne.s32.totalorder %s49, %s50
      %p61 = scmp.eq.s32.totalorder %s27, 0
      %p62 = por %p60, %p61
      %p63 = scmp.ne.s32.totalorder %s49, %s50
      %p64 = scmp.eq.s32.totalorder %s28, 1
      %p65 = por %p63, %p64
      %p67 = scmp.ne.s32.totalorder %s50, %s66
      %p68 = scmp.eq.s32.totalorder %s28, 0
      %p69 = por %p67, %p68
      %s70 = ssub.s32 %s29, %s41
      %p71 = scmp.eq.s32.totalorder %s70, 0
      %s73 = sadd.s32 %s72, 1
      %s74 = scalar_select %p71, %s72, %s73
      %p77 = pneg %p71
      %p78 = scmp.eq.s32.totalorder %s22, 1
      %p79 = por %p77, %p78
      %p80 = scmp.ne.s32.totalorder %s72, %s75
      %p81 = scmp.eq.s32.totalorder %s22, 0
      %p82 = por %p80, %p81
      %p83 = scmp.ne.s32.totalorder %s72, %s75
      %p84 = scmp.eq.s32.totalorder %s27, 1
      %p85 = por %p83, %p84
      %p86 = scmp.ne.s32.totalorder %s75, %s76
      %p87 = scmp.eq.s32.totalorder %s27, 0
      %p88 = por %p86, %p87
      %p89 = scmp.ne.s32.totalorder %s75, %s76
      %p90 = scmp.eq.s32.totalorder %s28, 1
      %p91 = por %p89, %p90
      %p93 = scmp.ne.s32.totalorder %s76, %s92
      %p94 = scmp.eq.s32.totalorder %s28, 0
      %p95 = por %p93, %p94
      %s96 = ssub.s32 %s29, %s41
      %p97 = scmp.eq.s32.totalorder %s96, 0
      %s99 = sadd.s32 %s98, 1
      %s100 = scalar_select %p97, %s98, %s99
      %p103 = pneg %p97
      %p104 = scmp.eq.s32.totalorder %s22, 1
      %p105 = por %p103, %p104
      %p106 = scmp.ne.s32.totalorder %s98, %s101
      %p107 = scmp.eq.s32.totalorder %s22, 0
      %p108 = por %p106, %p107
      %p109 = scmp.ne.s32.totalorder %s98, %s101
      %p110 = scmp.eq.s32.totalorder %s27, 1
      %p111 = por %p109, %p110
      %p112 = scmp.ne.s32.totalorder %s101, %s102
      %p113 = scmp.eq.s32.totalorder %s27, 0
      %p114 = por %p112, %p113
      %p115 = scmp.ne.s32.totalorder %s101, %s102
      %p116 = scmp.eq.s32.totalorder %s28, 1
      %p117 = por %p115, %p116
      %p119 = scmp.ne.s32.totalorder %s102, %s118
      %p120 = scmp.eq.s32.totalorder %s28, 0
      %p121 = por %p119, %p120
      %s123 = sadd.s32 %s122, 1
      %p126 = scmp.eq.s32.totalorder %s22, 1
      %p127 = scmp.ne.s32.totalorder %s122, %s124
      %p128 = scmp.eq.s32.totalorder %s22, 0
      %p129 = por %p127, %p128
      %p130 = scmp.ne.s32.totalorder %s122, %s124
      %p131 = scmp.eq.s32.totalorder %s27, 1
      %p132 = por %p130, %p131
      %p133 = scmp.ne.s32.totalorder %s124, %s125
      %p134 = scmp.eq.s32.totalorder %s27, 0
      %p135 = por %p133, %p134
      %p136 = scmp.ne.s32.totalorder %s124, %s125
      %p137 = scmp.eq.s32.totalorder %s28, 1
      %p138 = por %p136, %p137
      %p140 = scmp.ne.s32.totalorder %s125, %s139
      %p141 = scmp.eq.s32.totalorder %s28, 0
      %p142 = por %p140, %p141
      %s144 = sadd.s32 %s143, 1
      %p147 = scmp.eq.s32.totalorder %s22, 1
      %p148 = scmp.ne.s32.totalorder %s143, %s145
      %p149 = scmp.eq.s32.totalorder %s22, 0
      %p150 = por %p148, %p149
      %p151 = scmp.ne.s32.totalorder %s143, %s145
      %p152 = scmp.eq.s32.totalorder %s27, 1
      %p153 = por %p151, %p152
      %p154 = scmp.ne.s32.totalorder %s145, %s146
      %p155 = scmp.eq.s32.totalorder %s27, 0
      %p156 = por %p154, %p155
      %p157 = scmp.ne.s32.totalorder %s145, %s146
      %p158 = scmp.eq.s32.totalorder %s28, 1
      %p159 = por %p157, %p158
      %p161 = scmp.ne.s32.totalorder %s146, %s160
      %p162 = scmp.eq.s32.totalorder %s28, 0
      %p163 = por %p161, %p162
      %s165 = sadd.s32 %s164, 1
      %p168 = scmp.eq.s32.totalorder %s22, 1
      %p169 = scmp.ne.s32.totalorder %s164, %s166
      %p170 = scmp.eq.s32.totalorder %s22, 0
      %p171 = por %p169, %p170
      %p172 = scmp.ne.s32.totalorder %s164, %s166
      %p173 = scmp.eq.s32.totalorder %s27, 1
      %p174 = por %p172, %p173
      %p175 = scmp.ne.s32.totalorder %s166, %s167
      %p176 = scmp.eq.s32.totalorder %s27, 0
      %p177 = por %p175, %p176
      %p178 = scmp.ne.s32.totalorder %s166, %s167
      %p179 = scmp.eq.s32.totalorder %s28, 1
      %p180 = por %p178, %p179
      %p182 = scmp.ne.s32.totalorder %s167, %s181
      %p183 = scmp.eq.s32.totalorder %s28, 0
      %p184 = por %p182, %p183
      %s185 = ssub.s32 %s29, %s41
      %s186 = ssub.s32 %s30, %s37
      %s187 = sor.u32 %s185, %s186
      %p188 = scmp.eq.s32.totalorder %s187, 0
      %s190 = sadd.s32 %s189, 1
      %s191 = scalar_select %p188, %s189, %s190
      %p194 = pneg %p188
      %p195 = scmp.eq.s32.totalorder %s22, 1
      %p196 = por %p194, %p195
      %p197 = scmp.ne.s32.totalorder %s189, %s192
      %p198 = scmp.eq.s32.totalorder %s22, 0
      %p199 = por %p197, %p198
      %p200 = scmp.ne.s32.totalorder %s189, %s192
      %p201 = scmp.eq.s32.totalorder %s27, 1
      %p202 = por %p200, %p201
      %p203 = scmp.ne.s32.totalorder %s192, %s193
      %p204 = scmp.eq.s32.totalorder %s27, 0
      %p205 = por %p203, %p204
      %p206 = scmp.ne.s32.totalorder %s192, %s193
      %p207 = scmp.eq.s32.totalorder %s28, 1
      %p208 = por %p206, %p207
      %p210 = scmp.ne.s32.totalorder %s193, %s209
      %p211 = scmp.eq.s32.totalorder %s28, 0
      %p212 = por %p210, %p211
      %p213 = scmp.le.s32.totalorder 1, %s22
      %p214 = scmp.lt.s32.totalorder %s22, 3
      %p215 = pnand %p213, %p214
      %p216 = pneg %p215
      // Predicated region
      $region9: #{tpu_custom_call.1} parent=5 // pred_check
        _
      $region10: #{tpu_custom_call.1} parent=5 // pred_check_branch
        %218 = sbr.rel (%p215) target = $region12
      $region11: #{tpu_custom_call.1} parent=5 // pred_region
        %s219 = ssub.s32 %s22, 1
        // Predicated region
        $region13: #{tpu_custom_call.1} parent=11 // pred_check
          %p220 = pneg %p135
        $region14: #{tpu_custom_call.1} parent=11 // pred_check_branch
          %222 = sbr.rel (%p220) target = $region16
        $region15: #{tpu_custom_call.1} parent=11 // pred_region
          %s224 = ssub.s32 512, 512
          %225 = vsyncadd [#allocation8], %s224
          %s226 = sshll.u32 [#allocation9], 4
          %s227 = int_to_ptr.vmem [resolvable:$true] %s226
          %232 = dma.hbm_to_vmem [thread:$0]  %s3, 512, %s227, [#allocation8], 128, 128, 8
        $region16: #{tpu_custom_call.1} parent=11 // pred_fallthru
          _
        // Predicated region
        $region17: #{tpu_custom_call.1} parent=11 // pred_check
          %p233 = pneg %p156
        $region18: #{tpu_custom_call.1} parent=11 // pred_check_branch
          %235 = sbr.rel (%p233) target = $region20
        $region19: #{tpu_custom_call.1} parent=11 // pred_region
          %s237 = ssub.s32 512, 512
          %238 = vsyncadd [#allocation11], %s237
          %s239 = sshll.u32 [#allocation10], 4
          %s240 = int_to_ptr.vmem [resolvable:$true] %s239
          %245 = dma.hbm_to_vmem [thread:$0]  %s4, 512, %s240, [#allocation11], 128, 128, 8
        $region20: #{tpu_custom_call.1} parent=11 // pred_fallthru
          _
        // Predicated region
        $region21: #{tpu_custom_call.1} parent=11 // pred_check
          %p246 = pneg %p177
        $region22: #{tpu_custom_call.1} parent=11 // pred_check_branch
          %248 = sbr.rel (%p246) target = $region24
        $region23: #{tpu_custom_call.1} parent=11 // pred_region
          _
        $region24: #{tpu_custom_call.1} parent=11 // pred_fallthru
          _
      $region12: #{tpu_custom_call.1} parent=5 // pred_fallthru
        _
      %p249 = scmp.lt.s32.totalorder %s22, 2
      // Predicated region
      $region25: #{tpu_custom_call.1} parent=5 // pred_check
        %p250 = pneg %p249
      $region26: #{tpu_custom_call.1} parent=5 // pred_check_branch
        %252 = sbr.rel (%p250) target = $region28
      $region27: #{tpu_custom_call.1} parent=5 // pred_region
        // Predicated region
        $region29: #{tpu_custom_call.1} parent=27 // pred_check
          %p253 = pneg %p56
        $region30: #{tpu_custom_call.1} parent=27 // pred_check_branch
          %255 = sbr.rel (%p253) target = $region32
        $region31: #{tpu_custom_call.1} parent=27 // pred_region
          %s256 = sand.u32 %s46, 1
          %s257 = scalar_lea.sflag [#allocation5], %s256
          %s258 = sand.u32 %s46, 1
          %s259 = smul.addr %s258, 8
          %s260 = scalar_lea.vmem [#allocation4], %s259
          %s262 = ssub.s32 128, 128
          %263 = vsyncadd %s257, %s262
          %s264 = sadd.s32 %s30, %s29
          %s265 = smul.addr %s264, 128
          %s266 = scalar_lea.hbm %s0, %s265
          %s268 = sshll.u32 %s260, 4
          %s269 = int_to_ptr.vmem [resolvable:$true] %s268
          %271 = dma.hbm_to_vmem [thread:$0]  %s266, 128, %s269, %s257
        $region32: #{tpu_custom_call.1} parent=27 // pred_fallthru
          _
        // Predicated region
        $region33: #{tpu_custom_call.1} parent=27 // pred_check
          %p272 = pneg %p82
        $region34: #{tpu_custom_call.1} parent=27 // pred_check_branch
          %274 = sbr.rel (%p272) target = $region36
        $region35: #{tpu_custom_call.1} parent=27 // pred_region
          %s275 = sand.u32 %s22, 1
          %s276 = scalar_lea.sflag [#allocation8], %s275
          %s277 = sand.u32 %s72, 1
          %s278 = smul.addr %s277, 8
          %s279 = scalar_lea.vmem [#allocation7], %s278
          %s281 = ssub.s32 128, 128
          %282 = vsyncadd %s276, %s281
          %s283 = smul.addr %s29, 128
          %s284 = scalar_lea.hbm %s1, %s283
          %s286 = sshll.u32 %s279, 4
          %s287 = int_to_ptr.vmem [resolvable:$true] %s286
          %289 = dma.hbm_to_vmem [thread:$0]  %s284, 128, %s287, %s276
        $region36: #{tpu_custom_call.1} parent=27 // pred_fallthru
          _
        // Predicated region
        $region37: #{tpu_custom_call.1} parent=27 // pred_check
          %p290 = pneg %p108
        $region38: #{tpu_custom_call.1} parent=27 // pred_check_branch
          %292 = sbr.rel (%p290) target = $region40
        $region39: #{tpu_custom_call.1} parent=27 // pred_region
          %p293 = scmp.lt.s32.totalorder %s29, 1
          %s294 = scalar_select %p293, %s29, 1
          %s295 = scalar_lea.vmem %s2, %s294
        $region40: #{tpu_custom_call.1} parent=27 // pred_fallthru
          _
      $region28: #{tpu_custom_call.1} parent=5 // pred_fallthru
        _
      %p296 = scmp.le.s32.totalorder 1, %s22
      %p297 = scmp.lt.s32.totalorder %s22, 3
      %p298 = pnand %p296, %p297
      %p299 = pneg %p298
      // Predicated region
      $region41: #{tpu_custom_call.1} parent=5 // pred_check
        _
      $region42: #{tpu_custom_call.1} parent=5 // pred_check_branch
        %301 = sbr.rel (%p298) target = $region44
      $region43: #{tpu_custom_call.1} parent=5 // pred_region
        %s302 = ssub.s32 %s22, 1
        %s303 = sand.u32 %s49, 1
        %s304 = scalar_lea.sflag [#allocation5], %s303
        %s305 = sand.u32 %s49, 1
        %s306 = smul.addr %s305, 8
        %s307 = scalar_lea.vmem [#allocation4], %s306
        // Predicated region
        $region45: #{tpu_custom_call.1} parent=43 // pred_check
          %p308 = pneg %p62
        $region46: #{tpu_custom_call.1} parent=43 // pred_check_branch
          %310 = sbr.rel (%p308) target = $region48
        $region47: #{tpu_custom_call.1} parent=43 // pred_region
          %311 = dma.done %s304, 128
        $region48: #{tpu_custom_call.1} parent=43 // pred_fallthru
          _
        %s312 = sand.u32 %s27, 1
        %s313 = scalar_lea.sflag [#allocation8], %s312
        %s314 = sand.u32 %s75, 1
        %s315 = smul.addr %s314, 8
        %s316 = scalar_lea.vmem [#allocation7], %s315
        // Predicated region
        $region49: #{tpu_custom_call.1} parent=43 // pred_check
          %p317 = pneg %p88
        $region50: #{tpu_custom_call.1} parent=43 // pred_check_branch
          %319 = sbr.rel (%p317) target = $region52
        $region51: #{tpu_custom_call.1} parent=43 // pred_region
          %320 = dma.done %s313, 128
        $region52: #{tpu_custom_call.1} parent=43 // pred_fallthru
          _
        // Predicated region
        $region53: #{tpu_custom_call.1} parent=43 // pred_check
          %p321 = pneg %p135
        $region54: #{tpu_custom_call.1} parent=43 // pred_check_branch
          %323 = sbr.rel (%p321) target = $region56
        $region55: #{tpu_custom_call.1} parent=43 // pred_region
          %324 = dma.done [#allocation8], 512
        $region56: #{tpu_custom_call.1} parent=43 // pred_fallthru
          _
        // Predicated region
        $region57: #{tpu_custom_call.1} parent=43 // pred_check
          %p325 = pneg %p156
        $region58: #{tpu_custom_call.1} parent=43 // pred_check_branch
          %327 = sbr.rel (%p325) target = $region60
        $region59: #{tpu_custom_call.1} parent=43 // pred_region
          %328 = dma.done [#allocation11], 512
        $region60: #{tpu_custom_call.1} parent=43 // pred_fallthru
          _
        %s329 = sand.u32 %s49, 1
        %s330 = scalar_lea.sflag [#allocation5], %s329
        %s331 = sand.u32 %s49, 1
        %s332 = smul.addr %s331, 8
        %s333 = scalar_lea.vmem [#allocation4], %s332
        %p334 = pneg %p62
        %p335 = pneg %p59
        %s336 = sand.u32 %s27, 1
        %s337 = scalar_lea.sflag [#allocation8], %s336
        %s338 = sand.u32 %s75, 1
        %s339 = smul.addr %s338, 8
        %s340 = scalar_lea.vmem [#allocation7], %s339
        %p341 = pneg %p88
        %p342 = pneg %p85
        %p343 = scmp.lt.s32.totalorder %s31, 1
        %s344 = scalar_select %p343, %s31, 1
        %s345 = scalar_lea.vmem %s2, %s344
        %p346 = pneg %p114
        %p347 = pneg %p111
        %p348 = pneg %p135
        %p349 = pneg %p132
        %p350 = pneg %p156
        %p351 = pneg %p153
        %p352 = pneg %p177
        %p353 = pneg %p174
        %p354 = pneg %p205
        %p355 = pneg %p202
        %s356 = sand.u32 %s192, 1
        %s357 = scalar_lea.sflag [#allocation6], %s356
        %s358 = sand.u32 %s192, 1
        %s359 = smul.addr %s358, 8
        %s360 = scalar_lea.vmem [#allocation12], %s359
        %p361 = scmp.lt.s32.totalorder %s31, 1
        %s362 = scalar_select %p361, %s31, 1
        %s363 = scalar_lea.vmem %s2, %s362
        %p364 = scmp.eq.s32.totalorder %s32, 0
        // Predicated region
        $region61: #{tpu_custom_call.1} parent=43 // pred_check
          %p365 = pneg %p364
        $region62: #{tpu_custom_call.1} parent=43 // pred_check_branch
          %367 = sbr.rel (%p365) target = $region64
        $region63: #{tpu_custom_call.1} parent=43 // pred_region
          %v368 = vld [vmem:[%s316] sm:$0xff]
          %v369 = vld [vmem:[#allocation9] sm:$0xff]
          %v370 = vld [vmem:[#allocation9 + $0x8] sm:$0xff]
          %v371 = vld [vmem:[#allocation9 + $0x10] sm:$0xff]
          %v372 = vld [vmem:[#allocation9 + $0x18] sm:$0xff]
          %377 = vrot.lane.b32.xlu0 %v369, 96
          %v378 = vpop.permute.xlu0 %377
          %379 = vrot.lane.b32.xlu0 %v370, 96
          %v380 = vpop.permute.xlu0 %379
          %381 = vrot.lane.b32.xlu0 %v371, 96
          %v382 = vpop.permute.xlu0 %381
          %383 = vrot.lane.b32.xlu0 %v372, 96
          %v384 = vpop.permute.xlu0 %383
          %vm389 = vcmask 261120
          %v391 = vsel %vm389, %v368, 0
          %393 = vmatprep.subr.mxu0 0.0
          %394 = vmatpush1.msra.mxu0 %v378
          %395 = vmatprep.subr.mxu0 0.0
          %396 = vmatpush1.msra.mxu0 %v380
          %397 = vmatprep.subr.mxu0 0.0
          %398 = vmatpush1.msra.mxu0 %v382
          %399 = vmatprep.subr.mxu0 0.0
          %400 = vmatpush1.msra.mxu0 %v384
          %401 = vmatprep.subr.mxu0 0.0
          %402 = vmatpush1.msra.mxu0 0.0
          %403 = vmatprep.subr.mxu0 0.0
          %404 = vmatpush1.msra.mxu0 0.0
          %405 = vmatprep.subr.mxu0 0.0
          %406 = vmatpush1.msra.mxu0 0.0
          %407 = vmatprep.subr.mxu0 0.0
          %408 = vmatpush1.msra.mxu0 0.0
          %409 = vmatprep.subr.mxu0 0.0
          %410 = vmatpush1.msra.mxu0 0.0
          %411 = vmatprep.subr.mxu0 0.0
          %412 = vmatpush1.msra.mxu0 0.0
          %413 = vmatprep.subr.mxu0 0.0
          %414 = vmatpush1.msra.mxu0 0.0
          %415 = vmatprep.subr.mxu0 0.0
          %416 = vmatpush1.msra.mxu0 0.0
          %417 = vmatprep.subr.mxu0 0.0
          %418 = vmatpush1.msra.mxu0 0.0
          %419 = vmatprep.subr.mxu0 0.0
          %420 = vmatpush1.msra.mxu0 0.0
          %421 = vmatprep.subr.mxu0 0.0
          %422 = vmatpush1.msra.mxu0 0.0
          %423 = vmatprep.subr.mxu0 0.0
          %424 = vmatpush1.msra.mxu0 0.0
          %425 = vmatprep.subr.mxu0 0.0
          %426 = vmatpush1.msra.mxu0 0.0
          %427 = vmatprep.subr.mxu0 0.0
          %428 = vmatpush1.msra.mxu0 0.0
          %429 = vmatprep.subr.mxu0 0.0
          %430 = vmatpush1.msra.mxu0 0.0
          %431 = vmatprep.subr.mxu0 0.0
          %432 = vmatpush1.msra.mxu0 0.0
          %433 = vmatprep.subr.mxu0 0.0
          %434 = vmatpush1.msra.mxu0 0.0
          %435 = vmatprep.subr.mxu0 0.0
          %436 = vmatpush1.msra.mxu0 0.0
          %437 = vmatprep.subr.mxu0 0.0
          %438 = vmatpush1.msra.mxu0 0.0
          %439 = vmatprep.subr.mxu0 0.0
          %440 = vmatpush1.msra.mxu0 0.0
          %441 = vmatprep.subr.mxu0 0.0
          %442 = vmatpush1.msra.mxu0 0.0
          %443 = vmatprep.subr.mxu0 0.0
          %444 = vmatpush1.msra.mxu0 0.0
          %445 = vmatprep.subr.mxu0 0.0
          %446 = vmatpush1.msra.mxu0 0.0
          %447 = vmatprep.subr.mxu0 0.0
          %448 = vmatpush1.msra.mxu0 0.0
          %449 = vmatprep.subr.mxu0 0.0
          %450 = vmatpush1.msra.mxu0 0.0
          %451 = vmatprep.subr.mxu0 0.0
          %452 = vmatpush1.msra.mxu0 0.0
          %453 = vmatprep.subr.mxu0 0.0
          %454 = vmatpush1.msra.mxu0 0.0
          %455 = vmatprep.subr.mxu0 0.0
          %456 = vmatpush1.msra.mxu0 0.0
          %457 = vmatprep.mubr.f32.mxu0 0.0
          %458 = vmatmul.mubr.f32.gmra.mrb[0].mxu0 %v391
          %v459 = vpop.f32.mrb[0].mxu0
          %v460 = vadd.f32 0.0, %v459
          %v461 = vpop.f32.mrb[0].mxu0
          %462 = vdwg.mxu0
          %vm463 = vcmask 523264
          %464 = vst.msk [vmem:[#allocation2] sm:$0xff] %vm463, %v460
        $region64: #{tpu_custom_call.1} parent=43 // pred_fallthru
          _
        %v465 = vld [vmem:[%s307] sm:$0xff]
        %v466 = vld [vmem:[#allocation9] sm:$0xff]
        %v467 = vld [vmem:[#allocation9 + $0x8] sm:$0xff]
        %v468 = vld [vmem:[#allocation9 + $0x10] sm:$0xff]
        %v469 = vld [vmem:[#allocation9 + $0x18] sm:$0xff]
        %vm470 = vcmask 261120
        %v472 = vsel %vm470, %v465, 0
        %474 = vmatprep.subr.mxu0 0.0
        %475 = vmatpush1.msra.mxu0 %v466
        %476 = vmatprep.subr.mxu0 0.0
        %477 = vmatpush1.msra.mxu0 %v467
        %478 = vmatprep.subr.mxu0 0.0
        %479 = vmatpush1.msra.mxu0 %v468
        %480 = vmatprep.subr.mxu0 0.0
        %481 = vmatpush1.msra.mxu0 %v469
        %482 = vmatprep.subr.mxu0 0.0
        %483 = vmatpush1.msra.mxu0 0.0
        %484 = vmatprep.subr.mxu0 0.0
        %485 = vmatpush1.msra.mxu0 0.0
        %486 = vmatprep.subr.mxu0 0.0
        %487 = vmatpush1.msra.mxu0 0.0
        %488 = vmatprep.subr.mxu0 0.0
        %489 = vmatpush1.msra.mxu0 0.0
        %490 = vmatprep.subr.mxu0 0.0
        %491 = vmatpush1.msra.mxu0 0.0
        %492 = vmatprep.subr.mxu0 0.0
        %493 = vmatpush1.msra.mxu0 0.0
        %494 = vmatprep.subr.mxu0 0.0
        %495 = vmatpush1.msra.mxu0 0.0
        %496 = vmatprep.subr.mxu0 0.0
        %497 = vmatpush1.msra.mxu0 0.0
        %498 = vmatprep.subr.mxu0 0.0
        %499 = vmatpush1.msra.mxu0 0.0
        %500 = vmatprep.subr.mxu0 0.0
        %501 = vmatpush1.msra.mxu0 0.0
        %502 = vmatprep.subr.mxu0 0.0
        %503 = vmatpush1.msra.mxu0 0.0
        %504 = vmatprep.subr.mxu0 0.0
        %505 = vmatpush1.msra.mxu0 0.0
        %506 = vmatprep.subr.mxu0 0.0
        %507 = vmatpush1.msra.mxu0 0.0
        %508 = vmatprep.subr.mxu0 0.0
        %509 = vmatpush1.msra.mxu0 0.0
        %510 = vmatprep.subr.mxu0 0.0
        %511 = vmatpush1.msra.mxu0 0.0
        %512 = vmatprep.subr.mxu0 0.0
        %513 = vmatpush1.msra.mxu0 0.0
        %514 = vmatprep.subr.mxu0 0.0
        %515 = vmatpush1.msra.mxu0 0.0
        %516 = vmatprep.subr.mxu0 0.0
        %517 = vmatpush1.msra.mxu0 0.0
        %518 = vmatprep.subr.mxu0 0.0
        %519 = vmatpush1.msra.mxu0 0.0
        %520 = vmatprep.subr.mxu0 0.0
        %521 = vmatpush1.msra.mxu0 0.0
        %522 = vmatprep.subr.mxu0 0.0
        %523 = vmatpush1.msra.mxu0 0.0
        %524 = vmatprep.subr.mxu0 0.0
        %525 = vmatpush1.msra.mxu0 0.0
        %526 = vmatprep.subr.mxu0 0.0
        %527 = vmatpush1.msra.mxu0 0.0
        %528 = vmatprep.subr.mxu0 0.0
        %529 = vmatpush1.msra.mxu0 0.0
        %530 = vmatprep.subr.mxu0 0.0
        %531 = vmatpush1.msra.mxu0 0.0
        %532 = vmatprep.subr.mxu0 0.0
        %533 = vmatpush1.msra.mxu0 0.0
        %534 = vmatprep.subr.mxu0 0.0
        %535 = vmatpush1.msra.mxu0 0.0
        %536 = vmatprep.subr.mxu0 0.0
        %537 = vmatpush1.msra.mxu0 0.0
        %538 = vmatprep.mubr.f32.mxu0 0.0
        %539 = vmatmul.mubr.f32.gmra.mrb[0].mxu0 %v472
        %v540 = vpop.f32.mrb[0].mxu0
        %v541 = vadd.f32 0.0, %v540
        %v542 = vpop.f32.mrb[0].mxu0
        %543 = vdwg.mxu0
        %v544 = vld [vmem:[%s363] sm:$0x1]
        %v545 = vlaneseq
        %v546 = vshrl.u32 %v545, 7
        %s547 = smul.u32 %s32, 8
        %v548 = vstv %s547
        %v549 = vadd.s32 %v546, %v548
        %v550 = vlaneseq
        %v551 = vand.u32 %v550, 127
        %vm552 = vcmp.eq.s32.totalorder %v549, %v551
        %v554 = vlaneseq
        %v555 = vshrl.u32 %v554, 7
        %v556 = vsub.s32 0, %v555
        %v557 = vrot.slane %v544, %v556
        %v559 = vsel %vm552, 1.0, %v557
        %v560 = vld [vmem:[#allocation2] sm:$0xff]
        %vm561 = vcmask 31744
        %v563 = vsel %vm561, %v541, 0
        %v566 = vsel %vm561, %v560, 0
        %568 = vmatprep.subr.mxu0 0.0
        %569 = vmatpush1.xpose.msra.mxu0 %v566
        %570 = vmatprep.subr.mxu0 0.0
        %571 = vmatpush1.xpose.msra.mxu0 0.0
        %572 = vmatprep.subr.mxu0 0.0
        %573 = vmatpush1.xpose.msra.mxu0 0.0
        %574 = vmatprep.subr.mxu0 0.0
        %575 = vmatpush1.xpose.msra.mxu0 0.0
        %576 = vmatprep.subr.mxu0 0.0
        %577 = vmatpush1.xpose.msra.mxu0 0.0
        %578 = vmatprep.subr.mxu0 0.0
        %579 = vmatpush1.xpose.msra.mxu0 0.0
        %580 = vmatprep.subr.mxu0 0.0
        %581 = vmatpush1.xpose.msra.mxu0 0.0
        %582 = vmatprep.subr.mxu0 0.0
        %583 = vmatpush1.xpose.msra.mxu0 0.0
        %584 = vmatprep.subr.mxu0 0.0
        %585 = vmatpush1.xpose.msra.mxu0 0.0
        %586 = vmatprep.subr.mxu0 0.0
        %587 = vmatpush1.xpose.msra.mxu0 0.0
        %588 = vmatprep.subr.mxu0 0.0
        %589 = vmatpush1.xpose.msra.mxu0 0.0
        %590 = vmatprep.subr.mxu0 0.0
        %591 = vmatpush1.xpose.msra.mxu0 0.0
        %592 = vmatprep.subr.mxu0 0.0
        %593 = vmatpush1.xpose.msra.mxu0 0.0
        %594 = vmatprep.subr.mxu0 0.0
        %595 = vmatpush1.xpose.msra.mxu0 0.0
        %596 = vmatprep.subr.mxu0 0.0
        %597 = vmatpush1.xpose.msra.mxu0 0.0
        %598 = vmatprep.subr.mxu0 0.0
        %599 = vmatpush1.xpose.msra.mxu0 0.0
        %600 = vmatprep.subr.mxu0 0.0
        %601 = vmatpush1.xpose.msra.mxu0 0.0
        %602 = vmatprep.subr.mxu0 0.0
        %603 = vmatpush1.xpose.msra.mxu0 0.0
        %604 = vmatprep.subr.mxu0 0.0
        %605 = vmatpush1.xpose.msra.mxu0 0.0
        %606 = vmatprep.subr.mxu0 0.0
        %607 = vmatpush1.xpose.msra.mxu0 0.0
        %608 = vmatprep.subr.mxu0 0.0
        %609 = vmatpush1.xpose.msra.mxu0 0.0
        %610 = vmatprep.subr.mxu0 0.0
        %611 = vmatpush1.xpose.msra.mxu0 0.0
        %612 = vmatprep.subr.mxu0 0.0
        %613 = vmatpush1.xpose.msra.mxu0 0.0
        %614 = vmatprep.subr.mxu0 0.0
        %615 = vmatpush1.xpose.msra.mxu0 0.0
        %616 = vmatprep.subr.mxu0 0.0
        %617 = vmatpush1.xpose.msra.mxu0 0.0
        %618 = vmatprep.subr.mxu0 0.0
        %619 = vmatpush1.xpose.msra.mxu0 0.0
        %620 = vmatprep.subr.mxu0 0.0
        %621 = vmatpush1.xpose.msra.mxu0 0.0
        %622 = vmatprep.subr.mxu0 0.0
        %623 = vmatpush1.xpose.msra.mxu0 0.0
        %624 = vmatprep.subr.mxu0 0.0
        %625 = vmatpush1.xpose.msra.mxu0 0.0
        %626 = vmatprep.subr.mxu0 0.0
        %627 = vmatpush1.xpose.msra.mxu0 0.0
        %628 = vmatprep.subr.mxu0 0.0
        %629 = vmatpush1.xpose.msra.mxu0 0.0
        %630 = vmatprep.subr.mxu0 0.0
        %631 = vmatpush1.xpose.msra.mxu0 0.0
        %632 = vmatprep.mubr.f32.mxu0 0.0
        %633 = vmatmul.mubr.f32.gmra.mrb[0].mxu0 %v563
        %v634 = vpop.f32.mrb[0].mxu0
        %v635 = vadd.f32 0.0, %v634
        %v636 = vpop.f32.mrb[0].mxu0
        %637 = vdwg.mxu0
        %vm638 = vcmask 64512
        %v639 = vsel %vm638, %v635, -inf
        %640 = vmax.xlane.f32.xlu0 %v639
        %v641 = vpop.xlane.xlu0 %640
        %v642 = vsub.f32 %v635, %v641
        %v643 = vmul.f32 %v642, 1.442695
        %v644 = vpow.pop %v643
        %v645 = vmul.f32 %v644, %v559
        %v646 = vsel %vm638, %v645, 0.0
        %647 = vadd.xlane.f32.xlu0 %v646
        %v648 = vpop.xlane.xlu0 %647
        %v649 = vadd.f32 %v648, 1e-06
        %v650 = vrcp.pop %v649
        %v651 = vadd.f32 %v645, 1.25e-07
        %v652 = vmul.f32 %v651, %v650
        %653 = vrot.lane.b32.xlu0 %v560, 96
        %v654 = vpop.permute.xlu0 %653
        %v657 = vsel %vm638, %v652, 0
        %659 = vmatprep.subr.mxu0 0.0
        %660 = vmatpush1.msra.mxu0 %v654
        %661 = vmatprep.subr.mxu0 0.0
        %662 = vmatpush1.msra.mxu0 0.0
        %663 = vmatprep.subr.mxu0 0.0
        %664 = vmatpush1.msra.mxu0 0.0
        %665 = vmatprep.subr.mxu0 0.0
        %666 = vmatpush1.msra.mxu0 0.0
        %667 = vmatprep.subr.mxu0 0.0
        %668 = vmatpush1.msra.mxu0 0.0
        %669 = vmatprep.subr.mxu0 0.0
        %670 = vmatpush1.msra.mxu0 0.0
        %671 = vmatprep.subr.mxu0 0.0
        %672 = vmatpush1.msra.mxu0 0.0
        %673 = vmatprep.subr.mxu0 0.0
        %674 = vmatpush1.msra.mxu0 0.0
        %675 = vmatprep.subr.mxu0 0.0
        %676 = vmatpush1.msra.mxu0 0.0
        %677 = vmatprep.subr.mxu0 0.0
        %678 = vmatpush1.msra.mxu0 0.0
        %679 = vmatprep.subr.mxu0 0.0
        %680 = vmatpush1.msra.mxu0 0.0
        %681 = vmatprep.subr.mxu0 0.0
        %682 = vmatpush1.msra.mxu0 0.0
        %683 = vmatprep.subr.mxu0 0.0
        %684 = vmatpush1.msra.mxu0 0.0
        %685 = vmatprep.subr.mxu0 0.0
        %686 = vmatpush1.msra.mxu0 0.0
        %687 = vmatprep.subr.mxu0 0.0
        %688 = vmatpush1.msra.mxu0 0.0
        %689 = vmatprep.subr.mxu0 0.0
        %690 = vmatpush1.msra.mxu0 0.0
        %691 = vmatprep.subr.mxu0 0.0
        %692 = vmatpush1.msra.mxu0 0.0
        %693 = vmatprep.subr.mxu0 0.0
        %694 = vmatpush1.msra.mxu0 0.0
        %695 = vmatprep.subr.mxu0 0.0
        %696 = vmatpush1.msra.mxu0 0.0
        %697 = vmatprep.subr.mxu0 0.0
        %698 = vmatpush1.msra.mxu0 0.0
        %699 = vmatprep.subr.mxu0 0.0
        %700 = vmatpush1.msra.mxu0 0.0
        %701 = vmatprep.subr.mxu0 0.0
        %702 = vmatpush1.msra.mxu0 0.0
        %703 = vmatprep.subr.mxu0 0.0
        %704 = vmatpush1.msra.mxu0 0.0
        %705 = vmatprep.subr.mxu0 0.0
        %706 = vmatpush1.msra.mxu0 0.0
        %707 = vmatprep.subr.mxu0 0.0
        %708 = vmatpush1.msra.mxu0 0.0
        %709 = vmatprep.subr.mxu0 0.0
        %710 = vmatpush1.msra.mxu0 0.0
        %711 = vmatprep.subr.mxu0 0.0
        %712 = vmatpush1.msra.mxu0 0.0
        %713 = vmatprep.subr.mxu0 0.0
        %714 = vmatpush1.msra.mxu0 0.0
        %715 = vmatprep.subr.mxu0 0.0
        %716 = vmatpush1.msra.mxu0 0.0
        %717 = vmatprep.subr.mxu0 0.0
        %718 = vmatpush1.msra.mxu0 0.0
        %719 = vmatprep.subr.mxu0 0.0
        %720 = vmatpush1.msra.mxu0 0.0
        %721 = vmatprep.subr.mxu0 0.0
        %722 = vmatpush1.msra.mxu0 0.0
        %723 = vmatprep.mubr.f32.mxu0 0.0
        %724 = vmatmul.mubr.f32.gmra.mrb[0].mxu0 %v657
        %v725 = vpop.f32.mrb[0].mxu0
        %v726 = vadd.f32 0.0, %v725
        %v727 = vpop.f32.mrb[0].mxu0
        %728 = vdwg.mxu0
        %729 = vst.msk [vmem:[#allocation3] sm:$0xff] %vm561, %v726
        %v730 = vld [vmem:[#allocation2] sm:$0xff]
        %731 = vrot.lane.b32.xlu0 %v541, 124
        %v732 = vpop.permute.xlu0 %731
        %734 = vrot.lane.b32.xlu0 %v730, 124
        %v735 = vpop.permute.xlu0 %734
        %v736 = vsel %vm561, %v732, 0
        %v738 = vsel %vm561, %v735, 0
        %740 = vmatprep.subr.mxu0 0.0
        %741 = vmatpush1.xpose.msra.mxu0 %v738
        %742 = vmatprep.subr.mxu0 0.0
        %743 = vmatpush1.xpose.msra.mxu0 0.0
        %744 = vmatprep.subr.mxu0 0.0
        %745 = vmatpush1.xpose.msra.mxu0 0.0
        %746 = vmatprep.subr.mxu0 0.0
        %747 = vmatpush1.xpose.msra.mxu0 0.0
        %748 = vmatprep.subr.mxu0 0.0
        %749 = vmatpush1.xpose.msra.mxu0 0.0
        %750 = vmatprep.subr.mxu0 0.0
        %751 = vmatpush1.xpose.msra.mxu0 0.0
        %752 = vmatprep.subr.mxu0 0.0
        %753 = vmatpush1.xpose.msra.mxu0 0.0
        %754 = vmatprep.subr.mxu0 0.0
        %755 = vmatpush1.xpose.msra.mxu0 0.0
        %756 = vmatprep.subr.mxu0 0.0
        %757 = vmatpush1.xpose.msra.mxu0 0.0
        %758 = vmatprep.subr.mxu0 0.0
        %759 = vmatpush1.xpose.msra.mxu0 0.0
        %760 = vmatprep.subr.mxu0 0.0
        %761 = vmatpush1.xpose.msra.mxu0 0.0
        %762 = vmatprep.subr.mxu0 0.0
        %763 = vmatpush1.xpose.msra.mxu0 0.0
        %764 = vmatprep.subr.mxu0 0.0
        %765 = vmatpush1.xpose.msra.mxu0 0.0
        %766 = vmatprep.subr.mxu0 0.0
        %767 = vmatpush1.xpose.msra.mxu0 0.0
        %768 = vmatprep.subr.mxu0 0.0
        %769 = vmatpush1.xpose.msra.mxu0 0.0
        %770 = vmatprep.subr.mxu0 0.0
        %771 = vmatpush1.xpose.msra.mxu0 0.0
        %772 = vmatprep.subr.mxu0 0.0
        %773 = vmatpush1.xpose.msra.mxu0 0.0
        %774 = vmatprep.subr.mxu0 0.0
        %775 = vmatpush1.xpose.msra.mxu0 0.0
        %776 = vmatprep.subr.mxu0 0.0
        %777 = vmatpush1.xpose.msra.mxu0 0.0
        %778 = vmatprep.subr.mxu0 0.0
        %779 = vmatpush1.xpose.msra.mxu0 0.0
        %780 = vmatprep.subr.mxu0 0.0
        %781 = vmatpush1.xpose.msra.mxu0 0.0
        %782 = vmatprep.subr.mxu0 0.0
        %783 = vmatpush1.xpose.msra.mxu0 0.0
        %784 = vmatprep.subr.mxu0 0.0
        %785 = vmatpush1.xpose.msra.mxu0 0.0
        %786 = vmatprep.subr.mxu0 0.0
        %787 = vmatpush1.xpose.msra.mxu0 0.0
        %788 = vmatprep.subr.mxu0 0.0
        %789 = vmatpush1.xpose.msra.mxu0 0.0
        %790 = vmatprep.subr.mxu0 0.0
        %791 = vmatpush1.xpose.msra.mxu0 0.0
        %792 = vmatprep.subr.mxu0 0.0
        %793 = vmatpush1.xpose.msra.mxu0 0.0
        %794 = vmatprep.subr.mxu0 0.0
        %795 = vmatpush1.xpose.msra.mxu0 0.0
        %796 = vmatprep.subr.mxu0 0.0
        %797 = vmatpush1.xpose.msra.mxu0 0.0
        %798 = vmatprep.subr.mxu0 0.0
        %799 = vmatpush1.xpose.msra.mxu0 0.0
        %800 = vmatprep.subr.mxu0 0.0
        %801 = vmatpush1.xpose.msra.mxu0 0.0
        %802 = vmatprep.subr.mxu0 0.0
        %803 = vmatpush1.xpose.msra.mxu0 0.0
        %804 = vmatprep.mubr.f32.mxu0 0.0
        %805 = vmatmul.mubr.f32.gmra.mrb[0].mxu0 %v736
        %v806 = vpop.f32.mrb[0].mxu0
        %v807 = vadd.f32 0.0, %v806
        %v808 = vpop.f32.mrb[0].mxu0
        %809 = vdwg.mxu0
        %v810 = vsel %vm638, %v807, -inf
        %811 = vmax.xlane.f32.xlu0 %v810
        %v812 = vpop.xlane.xlu0 %811
        %v813 = vsub.f32 %v807, %v812
        %v814 = vmul.f32 %v813, 1.442695
        %v815 = vpow.pop %v814
        %v816 = vmul.f32 %v815, %v559
        %v817 = vsel %vm638, %v816, 0.0
        %818 = vadd.xlane.f32.xlu0 %v817
        %v819 = vpop.xlane.xlu0 %818
        %v820 = vadd.f32 %v819, 1e-06
        %v821 = vrcp.pop %v820
        %v822 = vadd.f32 %v816, 1.25e-07
        %v823 = vmul.f32 %v822, %v821
        %824 = vrot.lane.b32.xlu0 %v730, 92
        %v825 = vpop.permute.xlu0 %824
        %v828 = vsel %vm638, %v823, 0
        %830 = vmatprep.subr.mxu0 0.0
        %831 = vmatpush1.msra.mxu0 %v825
        %832 = vmatprep.subr.mxu0 0.0
        %833 = vmatpush1.msra.mxu0 0.0
        %834 = vmatprep.subr.mxu0 0.0
        %835 = vmatpush1.msra.mxu0 0.0
        %836 = vmatprep.subr.mxu0 0.0
        %837 = vmatpush1.msra.mxu0 0.0
        %838 = vmatprep.subr.mxu0 0.0
        %839 = vmatpush1.msra.mxu0 0.0
        %840 = vmatprep.subr.mxu0 0.0
        %841 = vmatpush1.msra.mxu0 0.0
        %842 = vmatprep.subr.mxu0 0.0
        %843 = vmatpush1.msra.mxu0 0.0
        %844 = vmatprep.subr.mxu0 0.0
        %845 = vmatpush1.msra.mxu0 0.0
        %846 = vmatprep.subr.mxu0 0.0
        %847 = vmatpush1.msra.mxu0 0.0
        %848 = vmatprep.subr.mxu0 0.0
        %849 = vmatpush1.msra.mxu0 0.0
        %850 = vmatprep.subr.mxu0 0.0
        %851 = vmatpush1.msra.mxu0 0.0
        %852 = vmatprep.subr.mxu0 0.0
        %853 = vmatpush1.msra.mxu0 0.0
        %854 = vmatprep.subr.mxu0 0.0
        %855 = vmatpush1.msra.mxu0 0.0
        %856 = vmatprep.subr.mxu0 0.0
        %857 = vmatpush1.msra.mxu0 0.0
        %858 = vmatprep.subr.mxu0 0.0
        %859 = vmatpush1.msra.mxu0 0.0
        %860 = vmatprep.subr.mxu0 0.0
        %861 = vmatpush1.msra.mxu0 0.0
        %862 = vmatprep.subr.mxu0 0.0
        %863 = vmatpush1.msra.mxu0 0.0
        %864 = vmatprep.subr.mxu0 0.0
        %865 = vmatpush1.msra.mxu0 0.0
        %866 = vmatprep.subr.mxu0 0.0
        %867 = vmatpush1.msra.mxu0 0.0
        %868 = vmatprep.subr.mxu0 0.0
        %869 = vmatpush1.msra.mxu0 0.0
        %870 = vmatprep.subr.mxu0 0.0
        %871 = vmatpush1.msra.mxu0 0.0
        %872 = vmatprep.subr.mxu0 0.0
        %873 = vmatpush1.msra.mxu0 0.0
        %874 = vmatprep.subr.mxu0 0.0
        %875 = vmatpush1.msra.mxu0 0.0
        %876 = vmatprep.subr.mxu0 0.0
        %877 = vmatpush1.msra.mxu0 0.0
        %878 = vmatprep.subr.mxu0 0.0
        %879 = vmatpush1.msra.mxu0 0.0
        %880 = vmatprep.subr.mxu0 0.0
        %881 = vmatpush1.msra.mxu0 0.0
        %882 = vmatprep.subr.mxu0 0.0
        %883 = vmatpush1.msra.mxu0 0.0
        %884 = vmatprep.subr.mxu0 0.0
        %885 = vmatpush1.msra.mxu0 0.0
        %886 = vmatprep.subr.mxu0 0.0
        %887 = vmatpush1.msra.mxu0 0.0
        %888 = vmatprep.subr.mxu0 0.0
        %889 = vmatpush1.msra.mxu0 0.0
        %890 = vmatprep.subr.mxu0 0.0
        %891 = vmatpush1.msra.mxu0 0.0
        %892 = vmatprep.subr.mxu0 0.0
        %893 = vmatpush1.msra.mxu0 0.0
        %894 = vmatprep.mubr.f32.mxu0 0.0
        %895 = vmatmul.mubr.f32.gmra.mrb[0].mxu0 %v828
        %v896 = vpop.f32.mrb[0].mxu0
        %v897 = vadd.f32 0.0, %v896
        %v898 = vpop.f32.mrb[0].mxu0
        %899 = vdwg.mxu0
        %901 = vrot.lane.b32.xlu0 %v897, 4
        %v902 = vpop.permute.xlu0 %901
        %vm904 = vcmask 64544
        %905 = vst.msk [vmem:[#allocation3] sm:$0xff] %vm904, %v902
        %v906 = vld [vmem:[#allocation2] sm:$0xff]
        %907 = vrot.lane.b32.xlu0 %v541, 120
        %v908 = vpop.permute.xlu0 %907
        %910 = vrot.lane.b32.xlu0 %v906, 120
        %v911 = vpop.permute.xlu0 %910
        %v912 = vsel %vm561, %v908, 0
        %v914 = vsel %vm561, %v911, 0
        %916 = vmatprep.subr.mxu0 0.0
        %917 = vmatpush1.xpose.msra.mxu0 %v914
        %918 = vmatprep.subr.mxu0 0.0
        %919 = vmatpush1.xpose.msra.mxu0 0.0
        %920 = vmatprep.subr.mxu0 0.0
        %921 = vmatpush1.xpose.msra.mxu0 0.0
        %922 = vmatprep.subr.mxu0 0.0
        %923 = vmatpush1.xpose.msra.mxu0 0.0
        %924 = vmatprep.subr.mxu0 0.0
        %925 = vmatpush1.xpose.msra.mxu0 0.0
        %926 = vmatprep.subr.mxu0 0.0
        %927 = vmatpush1.xpose.msra.mxu0 0.0
        %928 = vmatprep.subr.mxu0 0.0
        %929 = vmatpush1.xpose.msra.mxu0 0.0
        %930 = vmatprep.subr.mxu0 0.0
        %931 = vmatpush1.xpose.msra.mxu0 0.0
        %932 = vmatprep.subr.mxu0 0.0
        %933 = vmatpush1.xpose.msra.mxu0 0.0
        %934 = vmatprep.subr.mxu0 0.0
        %935 = vmatpush1.xpose.msra.mxu0 0.0
        %936 = vmatprep.subr.mxu0 0.0
        %937 = vmatpush1.xpose.msra.mxu0 0.0
        %938 = vmatprep.subr.mxu0 0.0
        %939 = vmatpush1.xpose.msra.mxu0 0.0
        %940 = vmatprep.subr.mxu0 0.0
        %941 = vmatpush1.xpose.msra.mxu0 0.0
        %942 = vmatprep.subr.mxu0 0.0
        %943 = vmatpush1.xpose.msra.mxu0 0.0
        %944 = vmatprep.subr.mxu0 0.0
        %945 = vmatpush1.xpose.msra.mxu0 0.0
        %946 = vmatprep.subr.mxu0 0.0
        %947 = vmatpush1.xpose.msra.mxu0 0.0
        %948 = vmatprep.subr.mxu0 0.0
        %949 = vmatpush1.xpose.msra.mxu0 0.0
        %950 = vmatprep.subr.mxu0 0.0
        %951 = vmatpush1.xpose.msra.mxu0 0.0
        %952 = vmatprep.subr.mxu0 0.0
        %953 = vmatpush1.xpose.msra.mxu0 0.0
        %954 = vmatprep.subr.mxu0 0.0
        %955 = vmatpush1.xpose.msra.mxu0 0.0
        %956 = vmatprep.subr.mxu0 0.0
        %957 = vmatpush1.xpose.msra.mxu0 0.0
        %958 = vmatprep.subr.mxu0 0.0
        %959 = vmatpush1.xpose.msra.mxu0 0.0
        %960 = vmatprep.subr.mxu0 0.0
        %961 = vmatpush1.xpose.msra.mxu0 0.0
        %962 = vmatprep.subr.mxu0 0.0
        %963 = vmatpush1.xpose.msra.mxu0 0.0
        %964 = vmatprep.subr.mxu0 0.0
        %965 = vmatpush1.xpose.msra.mxu0 0.0
        %966 = vmatprep.subr.mxu0 0.0
        %967 = vmatpush1.xpose.msra.mxu0 0.0
        %968 = vmatprep.subr.mxu0 0.0
        %969 = vmatpush1.xpose.msra.mxu0 0.0
        %970 = vmatprep.subr.mxu0 0.0
        %971 = vmatpush1.xpose.msra.mxu0 0.0
        %972 = vmatprep.subr.mxu0 0.0
        %973 = vmatpush1.xpose.msra.mxu0 0.0
        %974 = vmatprep.subr.mxu0 0.0
        %975 = vmatpush1.xpose.msra.mxu0 0.0
        %976 = vmatprep.subr.mxu0 0.0
        %977 = vmatpush1.xpose.msra.mxu0 0.0
        %978 = vmatprep.subr.mxu0 0.0
        %979 = vmatpush1.xpose.msra.mxu0 0.0
        %980 = vmatprep.mubr.f32.mxu0 0.0
        %981 = vmatmul.mubr.f32.gmra.mrb[0].mxu0 %v912
        %v982 = vpop.f32.mrb[0].mxu0
        %v983 = vadd.f32 0.0, %v982
        %v984 = vpop.f32.mrb[0].mxu0
        %985 = vdwg.mxu0
        %v986 = vsel %vm638, %v983, -inf
        %987 = vmax.xlane.f32.xlu0 %v986
        %v988 = vpop.xlane.xlu0 %987
        %v989 = vsub.f32 %v983, %v988
        %v990 = vmul.f32 %v989, 1.442695
        %v991 = vpow.pop %v990
        %v992 = vmul.f32 %v991, %v559
        %v993 = vsel %vm638, %v992, 0.0
        %994 = vadd.xlane.f32.xlu0 %v993
        %v995 = vpop.xlane.xlu0 %994
        %v996 = vadd.f32 %v995, 1e-06
        %v997 = vrcp.pop %v996
        %v998 = vadd.f32 %v992, 1.25e-07
        %v999 = vmul.f32 %v998, %v997
        %1000 = vrot.lane.b32.xlu0 %v906, 88
        %v1001 = vpop.permute.xlu0 %1000
        %v1004 = vsel %vm638, %v999, 0
        %1006 = vmatprep.subr.mxu0 0.0
        %1007 = vmatpush1.msra.mxu0 %v1001
        %1008 = vmatprep.subr.mxu0 0.0
        %1009 = vmatpush1.msra.mxu0 0.0
        %1010 = vmatprep.subr.mxu0 0.0
        %1011 = vmatpush1.msra.mxu0 0.0
        %1012 = vmatprep.subr.mxu0 0.0
        %1013 = vmatpush1.msra.mxu0 0.0
        %1014 = vmatprep.subr.mxu0 0.0
        %1015 = vmatpush1.msra.mxu0 0.0
        %1016 = vmatprep.subr.mxu0 0.0
        %1017 = vmatpush1.msra.mxu0 0.0
        %1018 = vmatprep.subr.mxu0 0.0
        %1019 = vmatpush1.msra.mxu0 0.0
        %1020 = vmatprep.subr.mxu0 0.0
        %1021 = vmatpush1.msra.mxu0 0.0
        %1022 = vmatprep.subr.mxu0 0.0
        %1023 = vmatpush1.msra.mxu0 0.0
        %1024 = vmatprep.subr.mxu0 0.0
        %1025 = vmatpush1.msra.mxu0 0.0
        %1026 = vmatprep.subr.mxu0 0.0
        %1027 = vmatpush1.msra.mxu0 0.0
        %1028 = vmatprep.subr.mxu0 0.0
        %1029 = vmatpush1.msra.mxu0 0.0
        %1030 = vmatprep.subr.mxu0 0.0
        %1031 = vmatpush1.msra.mxu0 0.0
        %1032 = vmatprep.subr.mxu0 0.0
        %1033 = vmatpush1.msra.mxu0 0.0
        %1034 = vmatprep.subr.mxu0 0.0
        %1035 = vmatpush1.msra.mxu0 0.0
        %1036 = vmatprep.subr.mxu0 0.0
        %1037 = vmatpush1.msra.mxu0 0.0
        %1038 = vmatprep.subr.mxu0 0.0
        %1039 = vmatpush1.msra.mxu0 0.0
        %1040 = vmatprep.subr.mxu0 0.0
        %1041 = vmatpush1.msra.mxu0 0.0
        %1042 = vmatprep.subr.mxu0 0.0
        %1043 = vmatpush1.msra.mxu0 0.0
        %1044 = vmatprep.subr.mxu0 0.0
        %1045 = vmatpush1.msra.mxu0 0.0
        %1046 = vmatprep.subr.mxu0 0.0
        %1047 = vmatpush1.msra.mxu0 0.0
        %1048 = vmatprep.subr.mxu0 0.0
        %1049 = vmatpush1.msra.mxu0 0.0
        %1050 = vmatprep.subr.mxu0 0.0
        %1051 = vmatpush1.msra.mxu0 0.0
        %1052 = vmatprep.subr.mxu0 0.0
        %1053 = vmatpush1.msra.mxu0 0.0
        %1054 = vmatprep.subr.mxu0 0.0
        %1055 = vmatpush1.msra.mxu0 0.0
        %1056 = vmatprep.subr.mxu0 0.0
        %1057 = vmatpush1.msra.mxu0 0.0
        %1058 = vmatprep.subr.mxu0 0.0
        %1059 = vmatpush1.msra.mxu0 0.0
        %1060 = vmatprep.subr.mxu0 0.0
        %1061 = vmatpush1.msra.mxu0 0.0
        %1062 = vmatprep.subr.mxu0 0.0
        %1063 = vmatpush1.msra.mxu0 0.0
        %1064 = vmatprep.subr.mxu0 0.0
        %1065 = vmatpush1.msra.mxu0 0.0
        %1066 = vmatprep.subr.mxu0 0.0
        %1067 = vmatpush1.msra.mxu0 0.0
        %1068 = vmatprep.subr.mxu0 0.0
        %1069 = vmatpush1.msra.mxu0 0.0
        %1070 = vmatprep.mubr.f32.mxu0 0.0
        %1071 = vmatmul.mubr.f32.gmra.mrb[0].mxu0 %v1004
        %v1072 = vpop.f32.mrb[0].mxu0
        %v1073 = vadd.f32 0.0, %v1072
        %v1074 = vpop.f32.mrb[0].mxu0
        %1075 = vdwg.mxu0
        %1077 = vrot.lane.b32.xlu0 %v1073, 8
        %v1078 = vpop.permute.xlu0 %1077
        %vm1080 = vcmask 97344
        %1081 = vst.msk [vmem:[#allocation3] sm:$0xff] %vm1080, %v1078
        %v1082 = vld [vmem:[#allocation2] sm:$0xff]
        %1083 = vrot.lane.b32.xlu0 %v541, 116
        %v1084 = vpop.permute.xlu0 %1083
        %1086 = vrot.lane.b32.xlu0 %v1082, 116
        %v1087 = vpop.permute.xlu0 %1086
        %v1088 = vsel %vm561, %v1084, 0
        %v1090 = vsel %vm561, %v1087, 0
        %1092 = vmatprep.subr.mxu0 0.0
        %1093 = vmatpush1.xpose.msra.mxu0 %v1090
        %1094 = vmatprep.subr.mxu0 0.0
        %1095 = vmatpush1.xpose.msra.mxu0 0.0
        %1096 = vmatprep.subr.mxu0 0.0
        %1097 = vmatpush1.xpose.msra.mxu0 0.0
        %1098 = vmatprep.subr.mxu0 0.0
        %1099 = vmatpush1.xpose.msra.mxu0 0.0
        %1100 = vmatprep.subr.mxu0 0.0
        %1101 = vmatpush1.xpose.msra.mxu0 0.0
        %1102 = vmatprep.subr.mxu0 0.0
        %1103 = vmatpush1.xpose.msra.mxu0 0.0
        %1104 = vmatprep.subr.mxu0 0.0
        %1105 = vmatpush1.xpose.msra.mxu0 0.0
        %1106 = vmatprep.subr.mxu0 0.0
        %1107 = vmatpush1.xpose.msra.mxu0 0.0
        %1108 = vmatprep.subr.mxu0 0.0
        %1109 = vmatpush1.xpose.msra.mxu0 0.0
        %1110 = vmatprep.subr.mxu0 0.0
        %1111 = vmatpush1.xpose.msra.mxu0 0.0
        %1112 = vmatprep.subr.mxu0 0.0
        %1113 = vmatpush1.xpose.msra.mxu0 0.0
        %1114 = vmatprep.subr.mxu0 0.0
        %1115 = vmatpush1.xpose.msra.mxu0 0.0
        %1116 = vmatprep.subr.mxu0 0.0
        %1117 = vmatpush1.xpose.msra.mxu0 0.0
        %1118 = vmatprep.subr.mxu0 0.0
        %1119 = vmatpush1.xpose.msra.mxu0 0.0
        %1120 = vmatprep.subr.mxu0 0.0
        %1121 = vmatpush1.xpose.msra.mxu0 0.0
        %1122 = vmatprep.subr.mxu0 0.0
        %1123 = vmatpush1.xpose.msra.mxu0 0.0
        %1124 = vmatprep.subr.mxu0 0.0
        %1125 = vmatpush1.xpose.msra.mxu0 0.0
        %1126 = vmatprep.subr.mxu0 0.0
        %1127 = vmatpush1.xpose.msra.mxu0 0.0
        %1128 = vmatprep.subr.mxu0 0.0
        %1129 = vmatpush1.xpose.msra.mxu0 0.0
        %1130 = vmatprep.subr.mxu0 0.0
        %1131 = vmatpush1.xpose.msra.mxu0 0.0
        %1132 = vmatprep.subr.mxu0 0.0
        %1133 = vmatpush1.xpose.msra.mxu0 0.0
        %1134 = vmatprep.subr.mxu0 0.0
        %1135 = vmatpush1.xpose.msra.mxu0 0.0
        %1136 = vmatprep.subr.mxu0 0.0
        %1137 = vmatpush1.xpose.msra.mxu0 0.0
        %1138 = vmatprep.subr.mxu0 0.0
        %1139 = vmatpush1.xpose.msra.mxu0 0.0
        %1140 = vmatprep.subr.mxu0 0.0
        %1141 = vmatpush1.xpose.msra.mxu0 0.0
        %1142 = vmatprep.subr.mxu0 0.0
        %1143 = vmatpush1.xpose.msra.mxu0 0.0
        %1144 = vmatprep.subr.mxu0 0.0
        %1145 = vmatpush1.xpose.msra.mxu0 0.0
        %1146 = vmatprep.subr.mxu0 0.0
        %1147 = vmatpush1.xpose.msra.mxu0 0.0
        %1148 = vmatprep.subr.mxu0 0.0
        %1149 = vmatpush1.xpose.msra.mxu0 0.0
        %1150 = vmatprep.subr.mxu0 0.0
        %1151 = vmatpush1.xpose.msra.mxu0 0.0
        %1152 = vmatprep.subr.mxu0 0.0
        %1153 = vmatpush1.xpose.msra.mxu0 0.0
        %1154 = vmatprep.subr.mxu0 0.0
        %1155 = vmatpush1.xpose.msra.mxu0 0.0
        %1156 = vmatprep.mubr.f32.mxu0 0.0
        %1157 = vmatmul.mubr.f32.gmra.mrb[0].mxu0 %v1088
        %v1158 = vpop.f32.mrb[0].mxu0
        %v1159 = vadd.f32 0.0, %v1158
        %v1160 = vpop.f32.mrb[0].mxu0
        %1161 = vdwg.mxu0
        %v1162 = vsel %vm638, %v1159, -inf
        %1163 = vmax.xlane.f32.xlu0 %v1162
        %v1164 = vpop.xlane.xlu0 %1163
        %v1165 = vsub.f32 %v1159, %v1164
        %v1166 = vmul.f32 %v1165, 1.442695
        %v1167 = vpow.pop %v1166
        %v1168 = vmul.f32 %v1167, %v559
        %v1169 = vsel %vm638, %v1168, 0.0
        %1170 = vadd.xlane.f32.xlu0 %v1169
        %v1171 = vpop.xlane.xlu0 %1170
        %v1172 = vadd.f32 %v1171, 1e-06
        %v1173 = vrcp.pop %v1172
        %v1174 = vadd.f32 %v1168, 1.25e-07
        %v1175 = vmul.f32 %v1174, %v1173
        %1176 = vrot.lane.b32.xlu0 %v1082, 84
        %v1177 = vpop.permute.xlu0 %1176
        %v1180 = vsel %vm638, %v1175, 0
        %1182 = vmatprep.subr.mxu0 0.0
        %1183 = vmatpush1.msra.mxu0 %v1177
        %1184 = vmatprep.subr.mxu0 0.0
        %1185 = vmatpush1.msra.mxu0 0.0
        %1186 = vmatprep.subr.mxu0 0.0
        %1187 = vmatpush1.msra.mxu0 0.0
        %1188 = vmatprep.subr.mxu0 0.0
        %1189 = vmatpush1.msra.mxu0 0.0
        %1190 = vmatprep.subr.mxu0 0.0
        %1191 = vmatpush1.msra.mxu0 0.0
        %1192 = vmatprep.subr.mxu0 0.0
        %1193 = vmatpush1.msra.mxu0 0.0
        %1194 = vmatprep.subr.mxu0 0.0
        %1195 = vmatpush1.msra.mxu0 0.0
        %1196 = vmatprep.subr.mxu0 0.0
        %1197 = vmatpush1.msra.mxu0 0.0
        %1198 = vmatprep.subr.mxu0 0.0
        %1199 = vmatpush1.msra.mxu0 0.0
        %1200 = vmatprep.subr.mxu0 0.0
        %1201 = vmatpush1.msra.mxu0 0.0
        %1202 = vmatprep.subr.mxu0 0.0
        %1203 = vmatpush1.msra.mxu0 0.0
        %1204 = vmatprep.subr.mxu0 0.0
        %1205 = vmatpush1.msra.mxu0 0.0
        %1206 = vmatprep.subr.mxu0 0.0
        %1207 = vmatpush1.msra.mxu0 0.0
        %1208 = vmatprep.subr.mxu0 0.0
        %1209 = vmatpush1.msra.mxu0 0.0
        %1210 = vmatprep.subr.mxu0 0.0
        %1211 = vmatpush1.msra.mxu0 0.0
        %1212 = vmatprep.subr.mxu0 0.0
        %1213 = vmatpush1.msra.mxu0 0.0
        %1214 = vmatprep.subr.mxu0 0.0
        %1215 = vmatpush1.msra.mxu0 0.0
        %1216 = vmatprep.subr.mxu0 0.0
        %1217 = vmatpush1.msra.mxu0 0.0
        %1218 = vmatprep.subr.mxu0 0.0
        %1219 = vmatpush1.msra.mxu0 0.0
        %1220 = vmatprep.subr.mxu0 0.0
        %1221 = vmatpush1.msra.mxu0 0.0
        %1222 = vmatprep.subr.mxu0 0.0
        %1223 = vmatpush1.msra.mxu0 0.0
        %1224 = vmatprep.subr.mxu0 0.0
        %1225 = vmatpush1.msra.mxu0 0.0
        %1226 = vmatprep.subr.mxu0 0.0
        %1227 = vmatpush1.msra.mxu0 0.0
        %1228 = vmatprep.subr.mxu0 0.0
        %1229 = vmatpush1.msra.mxu0 0.0
        %1230 = vmatprep.subr.mxu0 0.0
        %1231 = vmatpush1.msra.mxu0 0.0
        %1232 = vmatprep.subr.mxu0 0.0
        %1233 = vmatpush1.msra.mxu0 0.0
        %1234 = vmatprep.subr.mxu0 0.0
        %1235 = vmatpush1.msra.mxu0 0.0
        %1236 = vmatprep.subr.mxu0 0.0
        %1237 = vmatpush1.msra.mxu0 0.0
        %1238 = vmatprep.subr.mxu0 0.0
        %1239 = vmatpush1.msra.mxu0 0.0
        %1240 = vmatprep.subr.mxu0 0.0
        %1241 = vmatpush1.msra.mxu0 0.0
        %1242 = vmatprep.subr.mxu0 0.0
        %1243 = vmatpush1.msra.mxu0 0.0
        %1244 = vmatprep.subr.mxu0 0.0
        %1245 = vmatpush1.msra.mxu0 0.0
        %1246 = vmatprep.mubr.f32.mxu0 0.0
        %1247 = vmatmul.mubr.f32.gmra.mrb[0].mxu0 %v1180
        %v1248 = vpop.f32.mrb[0].mxu0
        %v1249 = vadd.f32 0.0, %v1248
        %v1250 = vpop.f32.mrb[0].mxu0
        %1251 = vdwg.mxu0
        %1253 = vrot.lane.b32.xlu0 %v1249, 12
        %v1254 = vpop.permute.xlu0 %1253
        %vm1256 = vcmask 130144
        %1257 = vst.msk [vmem:[#allocation3] sm:$0xff] %vm1256, %v1254
        %v1258 = vld [vmem:[#allocation2] sm:$0xff]
        %1259 = vrot.lane.b32.xlu0 %v541, 112
        %v1260 = vpop.permute.xlu0 %1259
        %1262 = vrot.lane.b32.xlu0 %v1258, 112
        %v1263 = vpop.permute.xlu0 %1262
        %v1264 = vsel %vm561, %v1260, 0
        %v1266 = vsel %vm561, %v1263, 0
        %1268 = vmatprep.subr.mxu0 0.0
        %1269 = vmatpush1.xpose.msra.mxu0 %v1266
        %1270 = vmatprep.subr.mxu0 0.0
        %1271 = vmatpush1.xpose.msra.mxu0 0.0
        %1272 = vmatprep.subr.mxu0 0.0
        %1273 = vmatpush1.xpose.msra.mxu0 0.0
        %1274 = vmatprep.subr.mxu0 0.0
        %1275 = vmatpush1.xpose.msra.mxu0 0.0
        %1276 = vmatprep.subr.mxu0 0.0
        %1277 = vmatpush1.xpose.msra.mxu0 0.0
        %1278 = vmatprep.subr.mxu0 0.0
        %1279 = vmatpush1.xpose.msra.mxu0 0.0
        %1280 = vmatprep.subr.mxu0 0.0
        %1281 = vmatpush1.xpose.msra.mxu0 0.0
        %1282 = vmatprep.subr.mxu0 0.0
        %1283 = vmatpush1.xpose.msra.mxu0 0.0
        %1284 = vmatprep.subr.mxu0 0.0
        %1285 = vmatpush1.xpose.msra.mxu0 0.0
        %1286 = vmatprep.subr.mxu0 0.0
        %1287 = vmatpush1.xpose.msra.mxu0 0.0
        %1288 = vmatprep.subr.mxu0 0.0
        %1289 = vmatpush1.xpose.msra.mxu0 0.0
        %1290 = vmatprep.subr.mxu0 0.0
        %1291 = vmatpush1.xpose.msra.mxu0 0.0
        %1292 = vmatprep.subr.mxu0 0.0
        %1293 = vmatpush1.xpose.msra.mxu0 0.0
        %1294 = vmatprep.subr.mxu0 0.0
        %1295 = vmatpush1.xpose.msra.mxu0 0.0
        %1296 = vmatprep.subr.mxu0 0.0
        %1297 = vmatpush1.xpose.msra.mxu0 0.0
        %1298 = vmatprep.subr.mxu0 0.0
        %1299 = vmatpush1.xpose.msra.mxu0 0.0
        %1300 = vmatprep.subr.mxu0 0.0
        %1301 = vmatpush1.xpose.msra.mxu0 0.0
        %1302 = vmatprep.subr.mxu0 0.0
        %1303 = vmatpush1.xpose.msra.mxu0 0.0
        %1304 = vmatprep.subr.mxu0 0.0
        %1305 = vmatpush1.xpose.msra.mxu0 0.0
        %1306 = vmatprep.subr.mxu0 0.0
        %1307 = vmatpush1.xpose.msra.mxu0 0.0
        %1308 = vmatprep.subr.mxu0 0.0
        %1309 = vmatpush1.xpose.msra.mxu0 0.0
        %1310 = vmatprep.subr.mxu0 0.0
        %1311 = vmatpush1.xpose.msra.mxu0 0.0
        %1312 = vmatprep.subr.mxu0 0.0
        %1313 = vmatpush1.xpose.msra.mxu0 0.0
        %1314 = vmatprep.subr.mxu0 0.0
        %1315 = vmatpush1.xpose.msra.mxu0 0.0
        %1316 = vmatprep.subr.mxu0 0.0
        %1317 = vmatpush1.xpose.msra.mxu0 0.0
        %1318 = vmatprep.subr.mxu0 0.0
        %1319 = vmatpush1.xpose.msra.mxu0 0.0
        %1320 = vmatprep.subr.mxu0 0.0
        %1321 = vmatpush1.xpose.msra.mxu0 0.0
        %1322 = vmatprep.subr.mxu0 0.0
        %1323 = vmatpush1.xpose.msra.mxu0 0.0
        %1324 = vmatprep.subr.mxu0 0.0
        %1325 = vmatpush1.xpose.msra.mxu0 0.0
        %1326 = vmatprep.subr.mxu0 0.0
        %1327 = vmatpush1.xpose.msra.mxu0 0.0
        %1328 = vmatprep.subr.mxu0 0.0
        %1329 = vmatpush1.xpose.msra.mxu0 0.0
        %1330 = vmatprep.subr.mxu0 0.0
        %1331 = vmatpush1.xpose.msra.mxu0 0.0
        %1332 = vmatprep.mubr.f32.mxu0 0.0
        %1333 = vmatmul.mubr.f32.gmra.mrb[0].mxu0 %v1264
        %v1334 = vpop.f32.mrb[0].mxu0
        %v1335 = vadd.f32 0.0, %v1334
        %v1336 = vpop.f32.mrb[0].mxu0
        %1337 = vdwg.mxu0
        %v1338 = vsel %vm638, %v1335, -inf
        %1339 = vmax.xlane.f32.xlu0 %v1338
        %v1340 = vpop.xlane.xlu0 %1339
        %v1341 = vsub.f32 %v1335, %v1340
        %v1342 = vmul.f32 %v1341, 1.442695
        %v1343 = vpow.pop %v1342
        %v1344 = vmul.f32 %v1343, %v559
        %v1345 = vsel %vm638, %v1344, 0.0
        %1346 = vadd.xlane.f32.xlu0 %v1345
        %v1347 = vpop.xlane.xlu0 %1346
        %v1348 = vadd.f32 %v1347, 1e-06
        %v1349 = vrcp.pop %v1348
        %v1350 = vadd.f32 %v1344, 1.25e-07
        %v1351 = vmul.f32 %v1350, %v1349
        %1352 = vrot.lane.b32.xlu0 %v1258, 80
        %v1353 = vpop.permute.xlu0 %1352
        %v1356 = vsel %vm638, %v1351, 0
        %1358 = vmatprep.subr.mxu0 0.0
        %1359 = vmatpush1.msra.mxu0 %v1353
        %1360 = vmatprep.subr.mxu0 0.0
        %1361 = vmatpush1.msra.mxu0 0.0
        %1362 = vmatprep.subr.mxu0 0.0
        %1363 = vmatpush1.msra.mxu0 0.0
        %1364 = vmatprep.subr.mxu0 0.0
        %1365 = vmatpush1.msra.mxu0 0.0
        %1366 = vmatprep.subr.mxu0 0.0
        %1367 = vmatpush1.msra.mxu0 0.0
        %1368 = vmatprep.subr.mxu0 0.0
        %1369 = vmatpush1.msra.mxu0 0.0
        %1370 = vmatprep.subr.mxu0 0.0
        %1371 = vmatpush1.msra.mxu0 0.0
        %1372 = vmatprep.subr.mxu0 0.0
        %1373 = vmatpush1.msra.mxu0 0.0
        %1374 = vmatprep.subr.mxu0 0.0
        %1375 = vmatpush1.msra.mxu0 0.0
        %1376 = vmatprep.subr.mxu0 0.0
        %1377 = vmatpush1.msra.mxu0 0.0
        %1378 = vmatprep.subr.mxu0 0.0
        %1379 = vmatpush1.msra.mxu0 0.0
        %1380 = vmatprep.subr.mxu0 0.0
        %1381 = vmatpush1.msra.mxu0 0.0
        %1382 = vmatprep.subr.mxu0 0.0
        %1383 = vmatpush1.msra.mxu0 0.0
        %1384 = vmatprep.subr.mxu0 0.0
        %1385 = vmatpush1.msra.mxu0 0.0
        %1386 = vmatprep.subr.mxu0 0.0
        %1387 = vmatpush1.msra.mxu0 0.0
        %1388 = vmatprep.subr.mxu0 0.0
        %1389 = vmatpush1.msra.mxu0 0.0
        %1390 = vmatprep.subr.mxu0 0.0
        %1391 = vmatpush1.msra.mxu0 0.0
        %1392 = vmatprep.subr.mxu0 0.0
        %1393 = vmatpush1.msra.mxu0 0.0
        %1394 = vmatprep.subr.mxu0 0.0
        %1395 = vmatpush1.msra.mxu0 0.0
        %1396 = vmatprep.subr.mxu0 0.0
        %1397 = vmatpush1.msra.mxu0 0.0
        %1398 = vmatprep.subr.mxu0 0.0
        %1399 = vmatpush1.msra.mxu0 0.0
        %1400 = vmatprep.subr.mxu0 0.0
        %1401 = vmatpush1.msra.mxu0 0.0
        %1402 = vmatprep.subr.mxu0 0.0
        %1403 = vmatpush1.msra.mxu0 0.0
        %1404 = vmatprep.subr.mxu0 0.0
        %1405 = vmatpush1.msra.mxu0 0.0
        %1406 = vmatprep.subr.mxu0 0.0
        %1407 = vmatpush1.msra.mxu0 0.0
        %1408 = vmatprep.subr.mxu0 0.0
        %1409 = vmatpush1.msra.mxu0 0.0
        %1410 = vmatprep.subr.mxu0 0.0
        %1411 = vmatpush1.msra.mxu0 0.0
        %1412 = vmatprep.subr.mxu0 0.0
        %1413 = vmatpush1.msra.mxu0 0.0
        %1414 = vmatprep.subr.mxu0 0.0
        %1415 = vmatpush1.msra.mxu0 0.0
        %1416 = vmatprep.subr.mxu0 0.0
        %1417 = vmatpush1.msra.mxu0 0.0
        %1418 = vmatprep.subr.mxu0 0.0
        %1419 = vmatpush1.msra.mxu0 0.0
        %1420 = vmatprep.subr.mxu0 0.0
        %1421 = vmatpush1.msra.mxu0 0.0
        %1422 = vmatprep.mubr.f32.mxu0 0.0
        %1423 = vmatmul.mubr.f32.gmra.mrb[0].mxu0 %v1356
        %v1424 = vpop.f32.mrb[0].mxu0
        %v1425 = vadd.f32 0.0, %v1424
        %v1426 = vpop.f32.mrb[0].mxu0
        %1427 = vdwg.mxu0
        %1429 = vrot.lane.b32.xlu0 %v1425, 16
        %v1430 = vpop.permute.xlu0 %1429
        %vm1432 = vcmask 162944
        %1433 = vst.msk [vmem:[#allocation3] sm:$0xff] %vm1432, %v1430
        %v1434 = vld [vmem:[#allocation2] sm:$0xff]
        %1435 = vrot.lane.b32.xlu0 %v541, 108
        %v1436 = vpop.permute.xlu0 %1435
        %1438 = vrot.lane.b32.xlu0 %v1434, 108
        %v1439 = vpop.permute.xlu0 %1438
        %v1440 = vsel %vm561, %v1436, 0
        %v1442 = vsel %vm561, %v1439, 0
        %1444 = vmatprep.subr.mxu0 0.0
        %1445 = vmatpush1.xpose.msra.mxu0 %v1442
        %1446 = vmatprep.subr.mxu0 0.0
        %1447 = vmatpush1.xpose.msra.mxu0 0.0
        %1448 = vmatprep.subr.mxu0 0.0
        %1449 = vmatpush1.xpose.msra.mxu0 0.0
        %1450 = vmatprep.subr.mxu0 0.0
        %1451 = vmatpush1.xpose.msra.mxu0 0.0
        %1452 = vmatprep.subr.mxu0 0.0
        %1453 = vmatpush1.xpose.msra.mxu0 0.0
        %1454 = vmatprep.subr.mxu0 0.0
        %1455 = vmatpush1.xpose.msra.mxu0 0.0
        %1456 = vmatprep.subr.mxu0 0.0
        %1457 = vmatpush1.xpose.msra.mxu0 0.0
        %1458 = vmatprep.subr.mxu0 0.0
        %1459 = vmatpush1.xpose.msra.mxu0 0.0
        %1460 = vmatprep.subr.mxu0 0.0
        %1461 = vmatpush1.xpose.msra.mxu0 0.0
        %1462 = vmatprep.subr.mxu0 0.0
        %1463 = vmatpush1.xpose.msra.mxu0 0.0
        %1464 = vmatprep.subr.mxu0 0.0
        %1465 = vmatpush1.xpose.msra.mxu0 0.0
        %1466 = vmatprep.subr.mxu0 0.0
        %1467 = vmatpush1.xpose.msra.mxu0 0.0
        %1468 = vmatprep.subr.mxu0 0.0
        %1469 = vmatpush1.xpose.msra.mxu0 0.0
        %1470 = vmatprep.subr.mxu0 0.0
        %1471 = vmatpush1.xpose.msra.mxu0 0.0
        %1472 = vmatprep.subr.mxu0 0.0
        %1473 = vmatpush1.xpose.msra.mxu0 0.0
        %1474 = vmatprep.subr.mxu0 0.0
        %1475 = vmatpush1.xpose.msra.mxu0 0.0
        %1476 = vmatprep.subr.mxu0 0.0
        %1477 = vmatpush1.xpose.msra.mxu0 0.0
        %1478 = vmatprep.subr.mxu0 0.0
        %1479 = vmatpush1.xpose.msra.mxu0 0.0
        %1480 = vmatprep.subr.mxu0 0.0
        %1481 = vmatpush1.xpose.msra.mxu0 0.0
        %1482 = vmatprep.subr.mxu0 0.0
        %1483 = vmatpush1.xpose.msra.mxu0 0.0
        %1484 = vmatprep.subr.mxu0 0.0
        %1485 = vmatpush1.xpose.msra.mxu0 0.0
        %1486 = vmatprep.subr.mxu0 0.0
        %1487 = vmatpush1.xpose.msra.mxu0 0.0
        %1488 = vmatprep.subr.mxu0 0.0
        %1489 = vmatpush1.xpose.msra.mxu0 0.0
        %1490 = vmatprep.subr.mxu0 0.0
        %1491 = vmatpush1.xpose.msra.mxu0 0.0
        %1492 = vmatprep.subr.mxu0 0.0
        %1493 = vmatpush1.xpose.msra.mxu0 0.0
        %1494 = vmatprep.subr.mxu0 0.0
        %1495 = vmatpush1.xpose.msra.mxu0 0.0
        %1496 = vmatprep.subr.mxu0 0.0
        %1497 = vmatpush1.xpose.msra.mxu0 0.0
        %1498 = vmatprep.subr.mxu0 0.0
        %1499 = vmatpush1.xpose.msra.mxu0 0.0
        %1500 = vmatprep.subr.mxu0 0.0
        %1501 = vmatpush1.xpose.msra.mxu0 0.0
        %1502 = vmatprep.subr.mxu0 0.0
        %1503 = vmatpush1.xpose.msra.mxu0 0.0
        %1504 = vmatprep.subr.mxu0 0.0
        %1505 = vmatpush1.xpose.msra.mxu0 0.0
        %1506 = vmatprep.subr.mxu0 0.0
        %1507 = vmatpush1.xpose.msra.mxu0 0.0
        %1508 = vmatprep.mubr.f32.mxu0 0.0
        %1509 = vmatmul.mubr.f32.gmra.mrb[0].mxu0 %v1440
        %v1510 = vpop.f32.mrb[0].mxu0
        %v1511 = vadd.f32 0.0, %v1510
        %v1512 = vpop.f32.mrb[0].mxu0
        %1513 = vdwg.mxu0
        %v1514 = vsel %vm638, %v1511, -inf
        %1515 = vmax.xlane.f32.xlu0 %v1514
        %v1516 = vpop.xlane.xlu0 %1515
        %v1517 = vsub.f32 %v1511, %v1516
        %v1518 = vmul.f32 %v1517, 1.442695
        %v1519 = vpow.pop %v1518
        %v1520 = vmul.f32 %v1519, %v559
        %v1521 = vsel %vm638, %v1520, 0.0
        %1522 = vadd.xlane.f32.xlu0 %v1521
        %v1523 = vpop.xlane.xlu0 %1522
        %v1524 = vadd.f32 %v1523, 1e-06
        %v1525 = vrcp.pop %v1524
        %v1526 = vadd.f32 %v1520, 1.25e-07
        %v1527 = vmul.f32 %v1526, %v1525
        %1528 = vrot.lane.b32.xlu0 %v1434, 76
        %v1529 = vpop.permute.xlu0 %1528
        %v1532 = vsel %vm638, %v1527, 0
        %1534 = vmatprep.subr.mxu0 0.0
        %1535 = vmatpush1.msra.mxu0 %v1529
        %1536 = vmatprep.subr.mxu0 0.0
        %1537 = vmatpush1.msra.mxu0 0.0
        %1538 = vmatprep.subr.mxu0 0.0
        %1539 = vmatpush1.msra.mxu0 0.0
        %1540 = vmatprep.subr.mxu0 0.0
        %1541 = vmatpush1.msra.mxu0 0.0
        %1542 = vmatprep.subr.mxu0 0.0
        %1543 = vmatpush1.msra.mxu0 0.0
        %1544 = vmatprep.subr.mxu0 0.0
        %1545 = vmatpush1.msra.mxu0 0.0
        %1546 = vmatprep.subr.mxu0 0.0
        %1547 = vmatpush1.msra.mxu0 0.0
        %1548 = vmatprep.subr.mxu0 0.0
        %1549 = vmatpush1.msra.mxu0 0.0
        %1550 = vmatprep.subr.mxu0 0.0
        %1551 = vmatpush1.msra.mxu0 0.0
        %1552 = vmatprep.subr.mxu0 0.0
        %1553 = vmatpush1.msra.mxu0 0.0
        %1554 = vmatprep.subr.mxu0 0.0
        %1555 = vmatpush1.msra.mxu0 0.0
        %1556 = vmatprep.subr.mxu0 0.0
        %1557 = vmatpush1.msra.mxu0 0.0
        %1558 = vmatprep.subr.mxu0 0.0
        %1559 = vmatpush1.msra.mxu0 0.0
        %1560 = vmatprep.subr.mxu0 0.0
        %1561 = vmatpush1.msra.mxu0 0.0
        %1562 = vmatprep.subr.mxu0 0.0
        %1563 = vmatpush1.msra.mxu0 0.0
        %1564 = vmatprep.subr.mxu0 0.0
        %1565 = vmatpush1.msra.mxu0 0.0
        %1566 = vmatprep.subr.mxu0 0.0
        %1567 = vmatpush1.msra.mxu0 0.0
        %1568 = vmatprep.subr.mxu0 0.0
        %1569 = vmatpush1.msra.mxu0 0.0
        %1570 = vmatprep.subr.mxu0 0.0
        %1571 = vmatpush1.msra.mxu0 0.0
        %1572 = vmatprep.subr.mxu0 0.0
        %1573 = vmatpush1.msra.mxu0 0.0
        %1574 = vmatprep.subr.mxu0 0.0
        %1575 = vmatpush1.msra.mxu0 0.0
        %1576 = vmatprep.subr.mxu0 0.0
        %1577 = vmatpush1.msra.mxu0 0.0
        %1578 = vmatprep.subr.mxu0 0.0
        %1579 = vmatpush1.msra.mxu0 0.0
        %1580 = vmatprep.subr.mxu0 0.0
        %1581 = vmatpush1.msra.mxu0 0.0
        %1582 = vmatprep.subr.mxu0 0.0
        %1583 = vmatpush1.msra.mxu0 0.0
        %1584 = vmatprep.subr.mxu0 0.0
        %1585 = vmatpush1.msra.mxu0 0.0
        %1586 = vmatprep.subr.mxu0 0.0
        %1587 = vmatpush1.msra.mxu0 0.0
        %1588 = vmatprep.subr.mxu0 0.0
        %1589 = vmatpush1.msra.mxu0 0.0
        %1590 = vmatprep.subr.mxu0 0.0
        %1591 = vmatpush1.msra.mxu0 0.0
        %1592 = vmatprep.subr.mxu0 0.0
        %1593 = vmatpush1.msra.mxu0 0.0
        %1594 = vmatprep.subr.mxu0 0.0
        %1595 = vmatpush1.msra.mxu0 0.0
        %1596 = vmatprep.subr.mxu0 0.0
        %1597 = vmatpush1.msra.mxu0 0.0
        %1598 = vmatprep.mubr.f32.mxu0 0.0
        %1599 = vmatmul.mubr.f32.gmra.mrb[0].mxu0 %v1532
        %v1600 = vpop.f32.mrb[0].mxu0
        %v1601 = vadd.f32 0.0, %v1600
        %v1602 = vpop.f32.mrb[0].mxu0
        %1603 = vdwg.mxu0
        %1605 = vrot.lane.b32.xlu0 %v1601, 20
        %v1606 = vpop.permute.xlu0 %1605
        %vm1608 = vcmask 195744
        %1609 = vst.msk [vmem:[#allocation3] sm:$0xff] %vm1608, %v1606
        %v1610 = vld [vmem:[#allocation2] sm:$0xff]
        %1611 = vrot.lane.b32.xlu0 %v541, 104
        %v1612 = vpop.permute.xlu0 %1611
        %1614 = vrot.lane.b32.xlu0 %v1610, 104
        %v1615 = vpop.permute.xlu0 %1614
        %v1616 = vsel %vm561, %v1612, 0
        %v1618 = vsel %vm561, %v1615, 0
        %1620 = vmatprep.subr.mxu0 0.0
        %1621 = vmatpush1.xpose.msra.mxu0 %v1618
        %1622 = vmatprep.subr.mxu0 0.0
        %1623 = vmatpush1.xpose.msra.mxu0 0.0
        %1624 = vmatprep.subr.mxu0 0.0
        %1625 = vmatpush1.xpose.msra.mxu0 0.0
        %1626 = vmatprep.subr.mxu0 0.0
        %1627 = vmatpush1.xpose.msra.mxu0 0.0
        %1628 = vmatprep.subr.mxu0 0.0
        %1629 = vmatpush1.xpose.msra.mxu0 0.0
        %1630 = vmatprep.subr.mxu0 0.0
        %1631 = vmatpush1.xpose.msra.mxu0 0.0
        %1632 = vmatprep.subr.mxu0 0.0
        %1633 = vmatpush1.xpose.msra.mxu0 0.0
        %1634 = vmatprep.subr.mxu0 0.0
        %1635 = vmatpush1.xpose.msra.mxu0 0.0
        %1636 = vmatprep.subr.mxu0 0.0
        %1637 = vmatpush1.xpose.msra.mxu0 0.0
        %1638 = vmatprep.subr.mxu0 0.0
        %1639 = vmatpush1.xpose.msra.mxu0 0.0
        %1640 = vmatprep.subr.mxu0 0.0
        %1641 = vmatpush1.xpose.msra.mxu0 0.0
        %1642 = vmatprep.subr.mxu0 0.0
        %1643 = vmatpush1.xpose.msra.mxu0 0.0
        %1644 = vmatprep.subr.mxu0 0.0
        %1645 = vmatpush1.xpose.msra.mxu0 0.0
        %1646 = vmatprep.subr.mxu0 0.0
        %1647 = vmatpush1.xpose.msra.mxu0 0.0
        %1648 = vmatprep.subr.mxu0 0.0
        %1649 = vmatpush1.xpose.msra.mxu0 0.0
        %1650 = vmatprep.subr.mxu0 0.0
        %1651 = vmatpush1.xpose.msra.mxu0 0.0
        %1652 = vmatprep.subr.mxu0 0.0
        %1653 = vmatpush1.xpose.msra.mxu0 0.0
        %1654 = vmatprep.subr.mxu0 0.0
        %1655 = vmatpush1.xpose.msra.mxu0 0.0
        %1656 = vmatprep.subr.mxu0 0.0
        %1657 = vmatpush1.xpose.msra.mxu0 0.0
        %1658 = vmatprep.subr.mxu0 0.0
        %1659 = vmatpush1.xpose.msra.mxu0 0.0
        %1660 = vmatprep.subr.mxu0 0.0
        %1661 = vmatpush1.xpose.msra.mxu0 0.0
        %1662 = vmatprep.subr.mxu0 0.0
        %1663 = vmatpush1.xpose.msra.mxu0 0.0
        %1664 = vmatprep.subr.mxu0 0.0
        %1665 = vmatpush1.xpose.msra.mxu0 0.0
        %1666 = vmatprep.subr.mxu0 0.0
        %1667 = vmatpush1.xpose.msra.mxu0 0.0
        %1668 = vmatprep.subr.mxu0 0.0
        %1669 = vmatpush1.xpose.msra.mxu0 0.0
        %1670 = vmatprep.subr.mxu0 0.0
        %1671 = vmatpush1.xpose.msra.mxu0 0.0
        %1672 = vmatprep.subr.mxu0 0.0
        %1673 = vmatpush1.xpose.msra.mxu0 0.0
        %1674 = vmatprep.subr.mxu0 0.0
        %1675 = vmatpush1.xpose.msra.mxu0 0.0
        %1676 = vmatprep.subr.mxu0 0.0
        %1677 = vmatpush1.xpose.msra.mxu0 0.0
        %1678 = vmatprep.subr.mxu0 0.0
        %1679 = vmatpush1.xpose.msra.mxu0 0.0
        %1680 = vmatprep.subr.mxu0 0.0
        %1681 = vmatpush1.xpose.msra.mxu0 0.0
        %1682 = vmatprep.subr.mxu0 0.0
        %1683 = vmatpush1.xpose.msra.mxu0 0.0
        %1684 = vmatprep.mubr.f32.mxu0 0.0
        %1685 = vmatmul.mubr.f32.gmra.mrb[0].mxu0 %v1616
        %v1686 = vpop.f32.mrb[0].mxu0
        %v1687 = vadd.f32 0.0, %v1686
        %v1688 = vpop.f32.mrb[0].mxu0
        %1689 = vdwg.mxu0
        %v1690 = vsel %vm638, %v1687, -inf
        %1691 = vmax.xlane.f32.xlu0 %v1690
        %v1692 = vpop.xlane.xlu0 %1691
        %v1693 = vsub.f32 %v1687, %v1692
        %v1694 = vmul.f32 %v1693, 1.442695
        %v1695 = vpow.pop %v1694
        %v1696 = vmul.f32 %v1695, %v559
        %v1697 = vsel %vm638, %v1696, 0.0
        %1698 = vadd.xlane.f32.xlu0 %v1697
        %v1699 = vpop.xlane.xlu0 %1698
        %v1700 = vadd.f32 %v1699, 1e-06
        %v1701 = vrcp.pop %v1700
        %v1702 = vadd.f32 %v1696, 1.25e-07
        %v1703 = vmul.f32 %v1702, %v1701
        %1704 = vrot.lane.b32.xlu0 %v1610, 72
        %v1705 = vpop.permute.xlu0 %1704
        %v1708 = vsel %vm638, %v1703, 0
        %1710 = vmatprep.subr.mxu0 0.0
        %1711 = vmatpush1.msra.mxu0 %v1705
        %1712 = vmatprep.subr.mxu0 0.0
        %1713 = vmatpush1.msra.mxu0 0.0
        %1714 = vmatprep.subr.mxu0 0.0
        %1715 = vmatpush1.msra.mxu0 0.0
        %1716 = vmatprep.subr.mxu0 0.0
        %1717 = vmatpush1.msra.mxu0 0.0
        %1718 = vmatprep.subr.mxu0 0.0
        %1719 = vmatpush1.msra.mxu0 0.0
        %1720 = vmatprep.subr.mxu0 0.0
        %1721 = vmatpush1.msra.mxu0 0.0
        %1722 = vmatprep.subr.mxu0 0.0
        %1723 = vmatpush1.msra.mxu0 0.0
        %1724 = vmatprep.subr.mxu0 0.0
        %1725 = vmatpush1.msra.mxu0 0.0
        %1726 = vmatprep.subr.mxu0 0.0
        %1727 = vmatpush1.msra.mxu0 0.0
        %1728 = vmatprep.subr.mxu0 0.0
        %1729 = vmatpush1.msra.mxu0 0.0
        %1730 = vmatprep.subr.mxu0 0.0
        %1731 = vmatpush1.msra.mxu0 0.0
        %1732 = vmatprep.subr.mxu0 0.0
        %1733 = vmatpush1.msra.mxu0 0.0
        %1734 = vmatprep.subr.mxu0 0.0
        %1735 = vmatpush1.msra.mxu0 0.0
        %1736 = vmatprep.subr.mxu0 0.0
        %1737 = vmatpush1.msra.mxu0 0.0
        %1738 = vmatprep.subr.mxu0 0.0
        %1739 = vmatpush1.msra.mxu0 0.0
        %1740 = vmatprep.subr.mxu0 0.0
        %1741 = vmatpush1.msra.mxu0 0.0
        %1742 = vmatprep.subr.mxu0 0.0
        %1743 = vmatpush1.msra.mxu0 0.0
        %1744 = vmatprep.subr.mxu0 0.0
        %1745 = vmatpush1.msra.mxu0 0.0
        %1746 = vmatprep.subr.mxu0 0.0
        %1747 = vmatpush1.msra.mxu0 0.0
        %1748 = vmatprep.subr.mxu0 0.0
        %1749 = vmatpush1.msra.mxu0 0.0
        %1750 = vmatprep.subr.mxu0 0.0
        %1751 = vmatpush1.msra.mxu0 0.0
        %1752 = vmatprep.subr.mxu0 0.0
        %1753 = vmatpush1.msra.mxu0 0.0
        %1754 = vmatprep.subr.mxu0 0.0
        %1755 = vmatpush1.msra.mxu0 0.0
        %1756 = vmatprep.subr.mxu0 0.0
        %1757 = vmatpush1.msra.mxu0 0.0
        %1758 = vmatprep.subr.mxu0 0.0
        %1759 = vmatpush1.msra.mxu0 0.0
        %1760 = vmatprep.subr.mxu0 0.0
        %1761 = vmatpush1.msra.mxu0 0.0
        %1762 = vmatprep.subr.mxu0 0.0
        %1763 = vmatpush1.msra.mxu0 0.0
        %1764 = vmatprep.subr.mxu0 0.0
        %1765 = vmatpush1.msra.mxu0 0.0
        %1766 = vmatprep.subr.mxu0 0.0
        %1767 = vmatpush1.msra.mxu0 0.0
        %1768 = vmatprep.subr.mxu0 0.0
        %1769 = vmatpush1.msra.mxu0 0.0
        %1770 = vmatprep.subr.mxu0 0.0
        %1771 = vmatpush1.msra.mxu0 0.0
        %1772 = vmatprep.subr.mxu0 0.0
        %1773 = vmatpush1.msra.mxu0 0.0
        %1774 = vmatprep.mubr.f32.mxu0 0.0
        %1775 = vmatmul.mubr.f32.gmra.mrb[0].mxu0 %v1708
        %v1776 = vpop.f32.mrb[0].mxu0
        %v1777 = vadd.f32 0.0, %v1776
        %v1778 = vpop.f32.mrb[0].mxu0
        %1779 = vdwg.mxu0
        %1781 = vrot.lane.b32.xlu0 %v1777, 24
        %v1782 = vpop.permute.xlu0 %1781
        %vm1784 = vcmask 228544
        %1785 = vst.msk [vmem:[#allocation3] sm:$0xff] %vm1784, %v1782
        %v1786 = vld [vmem:[#allocation2] sm:$0xff]
        %1787 = vrot.lane.b32.xlu0 %v541, 100
        %v1788 = vpop.permute.xlu0 %1787
        %1790 = vrot.lane.b32.xlu0 %v1786, 100
        %v1791 = vpop.permute.xlu0 %1790
        %v1792 = vsel %vm561, %v1788, 0
        %v1794 = vsel %vm561, %v1791, 0
        %1796 = vmatprep.subr.mxu0 0.0
        %1797 = vmatpush1.xpose.msra.mxu0 %v1794
        %1798 = vmatprep.subr.mxu0 0.0
        %1799 = vmatpush1.xpose.msra.mxu0 0.0
        %1800 = vmatprep.subr.mxu0 0.0
        %1801 = vmatpush1.xpose.msra.mxu0 0.0
        %1802 = vmatprep.subr.mxu0 0.0
        %1803 = vmatpush1.xpose.msra.mxu0 0.0
        %1804 = vmatprep.subr.mxu0 0.0
        %1805 = vmatpush1.xpose.msra.mxu0 0.0
        %1806 = vmatprep.subr.mxu0 0.0
        %1807 = vmatpush1.xpose.msra.mxu0 0.0
        %1808 = vmatprep.subr.mxu0 0.0
        %1809 = vmatpush1.xpose.msra.mxu0 0.0
        %1810 = vmatprep.subr.mxu0 0.0
        %1811 = vmatpush1.xpose.msra.mxu0 0.0
        %1812 = vmatprep.subr.mxu0 0.0
        %1813 = vmatpush1.xpose.msra.mxu0 0.0
        %1814 = vmatprep.subr.mxu0 0.0
        %1815 = vmatpush1.xpose.msra.mxu0 0.0
        %1816 = vmatprep.subr.mxu0 0.0
        %1817 = vmatpush1.xpose.msra.mxu0 0.0
        %1818 = vmatprep.subr.mxu0 0.0
        %1819 = vmatpush1.xpose.msra.mxu0 0.0
        %1820 = vmatprep.subr.mxu0 0.0
        %1821 = vmatpush1.xpose.msra.mxu0 0.0
        %1822 = vmatprep.subr.mxu0 0.0
        %1823 = vmatpush1.xpose.msra.mxu0 0.0
        %1824 = vmatprep.subr.mxu0 0.0
        %1825 = vmatpush1.xpose.msra.mxu0 0.0
        %1826 = vmatprep.subr.mxu0 0.0
        %1827 = vmatpush1.xpose.msra.mxu0 0.0
        %1828 = vmatprep.subr.mxu0 0.0
        %1829 = vmatpush1.xpose.msra.mxu0 0.0
        %1830 = vmatprep.subr.mxu0 0.0
        %1831 = vmatpush1.xpose.msra.mxu0 0.0
        %1832 = vmatprep.subr.mxu0 0.0
        %1833 = vmatpush1.xpose.msra.mxu0 0.0
        %1834 = vmatprep.subr.mxu0 0.0
        %1835 = vmatpush1.xpose.msra.mxu0 0.0
        %1836 = vmatprep.subr.mxu0 0.0
        %1837 = vmatpush1.xpose.msra.mxu0 0.0
        %1838 = vmatprep.subr.mxu0 0.0
        %1839 = vmatpush1.xpose.msra.mxu0 0.0
        %1840 = vmatprep.subr.mxu0 0.0
        %1841 = vmatpush1.xpose.msra.mxu0 0.0
        %1842 = vmatprep.subr.mxu0 0.0
        %1843 = vmatpush1.xpose.msra.mxu0 0.0
        %1844 = vmatprep.subr.mxu0 0.0
        %1845 = vmatpush1.xpose.msra.mxu0 0.0
        %1846 = vmatprep.subr.mxu0 0.0
        %1847 = vmatpush1.xpose.msra.mxu0 0.0
        %1848 = vmatprep.subr.mxu0 0.0
        %1849 = vmatpush1.xpose.msra.mxu0 0.0
        %1850 = vmatprep.subr.mxu0 0.0
        %1851 = vmatpush1.xpose.msra.mxu0 0.0
        %1852 = vmatprep.subr.mxu0 0.0
        %1853 = vmatpush1.xpose.msra.mxu0 0.0
        %1854 = vmatprep.subr.mxu0 0.0
        %1855 = vmatpush1.xpose.msra.mxu0 0.0
        %1856 = vmatprep.subr.mxu0 0.0
        %1857 = vmatpush1.xpose.msra.mxu0 0.0
        %1858 = vmatprep.subr.mxu0 0.0
        %1859 = vmatpush1.xpose.msra.mxu0 0.0
        %1860 = vmatprep.mubr.f32.mxu0 0.0
        %1861 = vmatmul.mubr.f32.gmra.mrb[0].mxu0 %v1792
        %v1862 = vpop.f32.mrb[0].mxu0
        %v1863 = vadd.f32 0.0, %v1862
        %v1864 = vpop.f32.mrb[0].mxu0
        %1865 = vdwg.mxu0
        %v1866 = vsel %vm638, %v1863, -inf
        %1867 = vmax.xlane.f32.xlu0 %v1866
        %v1868 = vpop.xlane.xlu0 %1867
        %v1869 = vsub.f32 %v1863, %v1868
        %v1870 = vmul.f32 %v1869, 1.442695
        %v1871 = vpow.pop %v1870
        %v1872 = vmul.f32 %v1871, %v559
        %v1873 = vsel %vm638, %v1872, 0.0
        %1874 = vadd.xlane.f32.xlu0 %v1873
        %v1875 = vpop.xlane.xlu0 %1874
        %v1876 = vadd.f32 %v1875, 1e-06
        %v1877 = vrcp.pop %v1876
        %v1878 = vadd.f32 %v1872, 1.25e-07
        %v1879 = vmul.f32 %v1878, %v1877
        %1880 = vrot.lane.b32.xlu0 %v1786, 68
        %v1881 = vpop.permute.xlu0 %1880
        %v1884 = vsel %vm638, %v1879, 0
        %1886 = vmatprep.subr.mxu0 0.0
        %1887 = vmatpush1.msra.mxu0 %v1881
        %1888 = vmatprep.subr.mxu0 0.0
        %1889 = vmatpush1.msra.mxu0 0.0
        %1890 = vmatprep.subr.mxu0 0.0
        %1891 = vmatpush1.msra.mxu0 0.0
        %1892 = vmatprep.subr.mxu0 0.0
        %1893 = vmatpush1.msra.mxu0 0.0
        %1894 = vmatprep.subr.mxu0 0.0
        %1895 = vmatpush1.msra.mxu0 0.0
        %1896 = vmatprep.subr.mxu0 0.0
        %1897 = vmatpush1.msra.mxu0 0.0
        %1898 = vmatprep.subr.mxu0 0.0
        %1899 = vmatpush1.msra.mxu0 0.0
        %1900 = vmatprep.subr.mxu0 0.0
        %1901 = vmatpush1.msra.mxu0 0.0
        %1902 = vmatprep.subr.mxu0 0.0
        %1903 = vmatpush1.msra.mxu0 0.0
        %1904 = vmatprep.subr.mxu0 0.0
        %1905 = vmatpush1.msra.mxu0 0.0
        %1906 = vmatprep.subr.mxu0 0.0
        %1907 = vmatpush1.msra.mxu0 0.0
        %1908 = vmatprep.subr.mxu0 0.0
        %1909 = vmatpush1.msra.mxu0 0.0
        %1910 = vmatprep.subr.mxu0 0.0
        %1911 = vmatpush1.msra.mxu0 0.0
        %1912 = vmatprep.subr.mxu0 0.0
        %1913 = vmatpush1.msra.mxu0 0.0
        %1914 = vmatprep.subr.mxu0 0.0
        %1915 = vmatpush1.msra.mxu0 0.0
        %1916 = vmatprep.subr.mxu0 0.0
        %1917 = vmatpush1.msra.mxu0 0.0
        %1918 = vmatprep.subr.mxu0 0.0
        %1919 = vmatpush1.msra.mxu0 0.0
        %1920 = vmatprep.subr.mxu0 0.0
        %1921 = vmatpush1.msra.mxu0 0.0
        %1922 = vmatprep.subr.mxu0 0.0
        %1923 = vmatpush1.msra.mxu0 0.0
        %1924 = vmatprep.subr.mxu0 0.0
        %1925 = vmatpush1.msra.mxu0 0.0
        %1926 = vmatprep.subr.mxu0 0.0
        %1927 = vmatpush1.msra.mxu0 0.0
        %1928 = vmatprep.subr.mxu0 0.0
        %1929 = vmatpush1.msra.mxu0 0.0
        %1930 = vmatprep.subr.mxu0 0.0
        %1931 = vmatpush1.msra.mxu0 0.0
        %1932 = vmatprep.subr.mxu0 0.0
        %1933 = vmatpush1.msra.mxu0 0.0
        %1934 = vmatprep.subr.mxu0 0.0
        %1935 = vmatpush1.msra.mxu0 0.0
        %1936 = vmatprep.subr.mxu0 0.0
        %1937 = vmatpush1.msra.mxu0 0.0
        %1938 = vmatprep.subr.mxu0 0.0
        %1939 = vmatpush1.msra.mxu0 0.0
        %1940 = vmatprep.subr.mxu0 0.0
        %1941 = vmatpush1.msra.mxu0 0.0
        %1942 = vmatprep.subr.mxu0 0.0
        %1943 = vmatpush1.msra.mxu0 0.0
        %1944 = vmatprep.subr.mxu0 0.0
        %1945 = vmatpush1.msra.mxu0 0.0
        %1946 = vmatprep.subr.mxu0 0.0
        %1947 = vmatpush1.msra.mxu0 0.0
        %1948 = vmatprep.subr.mxu0 0.0
        %1949 = vmatpush1.msra.mxu0 0.0
        %1950 = vmatprep.mubr.f32.mxu0 0.0
        %1951 = vmatmul.mubr.f32.gmra.mrb[0].mxu0 %v1884
        %v1952 = vpop.f32.mrb[0].mxu0
        %v1953 = vadd.f32 0.0, %v1952
        %v1954 = vpop.f32.mrb[0].mxu0
        %1955 = vdwg.mxu0
        %1957 = vrot.lane.b32.xlu0 %v1953, 28
        %v1958 = vpop.permute.xlu0 %1957
        %vm1960 = vcmask 261344
        %1961 = vst.msk [vmem:[#allocation3] sm:$0xff] %vm1960, %v1958
        %v1962 = vld [vmem:[#allocation3] sm:$0xff]
        %v1963 = vld [vmem:[#allocation10] sm:$0xff]
        %v1964 = vld [vmem:[#allocation10 + $0x8] sm:$0xff]
        %v1965 = vld [vmem:[#allocation10 + $0x10] sm:$0xff]
        %v1966 = vld [vmem:[#allocation10 + $0x18] sm:$0xff]
        %v1967 = vld [vmem:[%s5] sm:$0x1]
        %v1969 = vlaneseq
        %v1970 = vshrl.u32 %v1969, 7
        %v1971 = vsub.s32 0, %v1970
        %v1972 = vrot.slane %v1967, %v1971
        %v1975 = vsel %vm470, %v1962, 0
        %1977 = vmatprep.subr.mxu0 0.0
        %1978 = vmatpush1.msra.mxu0 %v1963
        %1979 = vmatprep.subr.mxu0 0.0
        %1980 = vmatpush1.msra.mxu0 %v1964
        %1981 = vmatprep.subr.mxu0 0.0
        %1982 = vmatpush1.msra.mxu0 %v1965
        %1983 = vmatprep.subr.mxu0 0.0
        %1984 = vmatpush1.msra.mxu0 %v1966
        %1985 = vmatprep.subr.mxu0 0.0
        %1986 = vmatpush1.msra.mxu0 0.0
        %1987 = vmatprep.subr.mxu0 0.0
        %1988 = vmatpush1.msra.mxu0 0.0
        %1989 = vmatprep.subr.mxu0 0.0
        %1990 = vmatpush1.msra.mxu0 0.0
        %1991 = vmatprep.subr.mxu0 0.0
        %1992 = vmatpush1.msra.mxu0 0.0
        %1993 = vmatprep.subr.mxu0 0.0
        %1994 = vmatpush1.msra.mxu0 0.0
        %1995 = vmatprep.subr.mxu0 0.0
        %1996 = vmatpush1.msra.mxu0 0.0
        %1997 = vmatprep.subr.mxu0 0.0
        %1998 = vmatpush1.msra.mxu0 0.0
        %1999 = vmatprep.subr.mxu0 0.0
        %2000 = vmatpush1.msra.mxu0 0.0
        %2001 = vmatprep.subr.mxu0 0.0
        %2002 = vmatpush1.msra.mxu0 0.0
        %2003 = vmatprep.subr.mxu0 0.0
        %2004 = vmatpush1.msra.mxu0 0.0
        %2005 = vmatprep.subr.mxu0 0.0
        %2006 = vmatpush1.msra.mxu0 0.0
        %2007 = vmatprep.subr.mxu0 0.0
        %2008 = vmatpush1.msra.mxu0 0.0
        %2009 = vmatprep.subr.mxu0 0.0
        %2010 = vmatpush1.msra.mxu0 0.0
        %2011 = vmatprep.subr.mxu0 0.0
        %2012 = vmatpush1.msra.mxu0 0.0
        %2013 = vmatprep.subr.mxu0 0.0
        %2014 = vmatpush1.msra.mxu0 0.0
        %2015 = vmatprep.subr.mxu0 0.0
        %2016 = vmatpush1.msra.mxu0 0.0
        %2017 = vmatprep.subr.mxu0 0.0
        %2018 = vmatpush1.msra.mxu0 0.0
        %2019 = vmatprep.subr.mxu0 0.0
        %2020 = vmatpush1.msra.mxu0 0.0
        %2021 = vmatprep.subr.mxu0 0.0
        %2022 = vmatpush1.msra.mxu0 0.0
        %2023 = vmatprep.subr.mxu0 0.0
        %2024 = vmatpush1.msra.mxu0 0.0
        %2025 = vmatprep.subr.mxu0 0.0
        %2026 = vmatpush1.msra.mxu0 0.0
        %2027 = vmatprep.subr.mxu0 0.0
        %2028 = vmatpush1.msra.mxu0 0.0
        %2029 = vmatprep.subr.mxu0 0.0
        %2030 = vmatpush1.msra.mxu0 0.0
        %2031 = vmatprep.subr.mxu0 0.0
        %2032 = vmatpush1.msra.mxu0 0.0
        %2033 = vmatprep.subr.mxu0 0.0
        %2034 = vmatpush1.msra.mxu0 0.0
        %2035 = vmatprep.subr.mxu0 0.0
        %2036 = vmatpush1.msra.mxu0 0.0
        %2037 = vmatprep.subr.mxu0 0.0
        %2038 = vmatpush1.msra.mxu0 0.0
        %2039 = vmatprep.subr.mxu0 0.0
        %2040 = vmatpush1.msra.mxu0 0.0
        %2041 = vmatprep.mubr.f32.mxu0 0.0
        %2042 = vmatmul.mubr.f32.gmra.mrb[0].mxu0 %v1975
        %v2043 = vpop.f32.mrb[0].mxu0
        %v2044 = vadd.f32 %v1972, %v2043
        %v2045 = vpop.f32.mrb[0].mxu0
        %2046 = vdwg.mxu0
        %2047 = vst.msk [vmem:[%s360] sm:$0xff] %vm470, %v2044
        %s2048 = sand.u32 %s192, 1
        %s2049 = scalar_lea.sflag [#allocation6], %s2048
        %s2050 = sand.u32 %s192, 1
        %s2051 = smul.addr %s2050, 8
        %s2052 = scalar_lea.vmem [#allocation12], %s2051
        // Predicated region
        $region65: #{tpu_custom_call.1} parent=43 // pred_check
          %p2053 = pneg %p202
        $region66: #{tpu_custom_call.1} parent=43 // pred_check_branch
          %2055 = sbr.rel (%p2053) target = $region68
        $region67: #{tpu_custom_call.1} parent=43 // pred_region
          %s2057 = ssub.s32 128, 128
          %2058 = vsyncadd %s2049, %s2057
          %s2059 = sadd.s32 %s32, %s31
          %s2060 = smul.addr %s2059, 128
          %s2061 = scalar_lea.hbm %s6, %s2060
          %s2063 = sshll.u32 %s2052, 4
          %s2064 = int_to_ptr.vmem [resolvable:$true] %s2063
          %2066 = dma.vmem_to_hbm [thread:$0]  %s2064, 128, %s2061, %s2049
        $region68: #{tpu_custom_call.1} parent=43 // pred_fallthru
          _
      $region44: #{tpu_custom_call.1} parent=5 // pred_fallthru
        _
      %p2067 = scmp.le.s32.totalorder 2, %s22
      // Predicated region
      $region69: #{tpu_custom_call.1} parent=5 // pred_check
        %p2068 = pneg %p2067
      $region70: #{tpu_custom_call.1} parent=5 // pred_check_branch
        %2070 = sbr.rel (%p2068) target = $region72
      $region71: #{tpu_custom_call.1} parent=5 // pred_region
        %s2071 = ssub.s32 %s22, 2
        // Predicated region
        $region73: #{tpu_custom_call.1} parent=71 // pred_check
          %p2072 = pneg %p208
        $region74: #{tpu_custom_call.1} parent=71 // pred_check_branch
          %2074 = sbr.rel (%p2072) target = $region76
        $region75: #{tpu_custom_call.1} parent=71 // pred_region
          %s2075 = sand.u32 %s193, 1
          %s2076 = scalar_lea.sflag [#allocation6], %s2075
          %s2077 = sand.u32 %s193, 1
          %s2078 = smul.addr %s2077, 8
          %s2079 = scalar_lea.vmem [#allocation12], %s2078
          %2080 = dma.done %s2076, 128
        $region76: #{tpu_custom_call.1} parent=71 // pred_fallthru
          _
      $region72: #{tpu_custom_call.1} parent=5 // pred_fallthru
        _
    $region6: #{tpu_custom_call.1} parent=1 // loop_footer
      %s26 = sadd.s32 1, %s22
    $region7: #{tpu_custom_call.1} parent=1 // loop_footer_branch
      %21 = sbr.rel target = $region3
    $region8: #{tpu_custom_call.1} parent=1 // loop_exit
      _
    %2081 = vsyncpa [#allocation5], 1
    %s2082 = scalar_lea.sflag [#allocation5], 1
    %2083 = vsyncpa %s2082, 1
    %2084 = vsyncpa [#allocation8], 1
    %s2085 = scalar_lea.sflag [#allocation8], 1
    %2086 = vsyncpa %s2085, 1
    %2087 = vsyncpa [#allocation11], 1
    %2088 = vsyncpa [#allocation6], 1
    %s2089 = scalar_lea.sflag [#allocation6], 1
    %2090 = vsyncpa %s2089, 1

</llo_original>
